<compile_context>
chip_gen: v6e
topology: v6e:2x2x1
jax: 0.10.0
libtpu: 0.0.40
codegen_flags: <defaults>
</compile_context>

<pallas_src>
import jax
import jax.numpy as jnp
import numpy as np
from jax import lax
from jax.experimental import pallas as pl
from jax.experimental.pallas import tpu as pltpu

H = 50          # LSTM hidden size (real)
HP = 128        # hidden size padded to one lane-tile per gate
F_IN = 6        # 1 + 4 + 1 projection input features


def confidence_lstm_kernel(x_ref, lens_ref, tokmask_ref,
                           wp_ref, bp_ref,
                           wih_ref, bx_ref,
                           whh_ref,
                           wout_ref, bout_ref,
                           out_ref,
                           gx_scr):
    """One batch chunk of BC rows per grid step.

    x_ref:       (T*BC, 6)   f32   time-major flattened [examples, one_hot]
    lens_ref:    (BC, 1)     int32 sequence lengths (pad rows = 0)
    tokmask_ref: (BC, T)     f32   1.0 where src_token_mask is True
    wp/bp:       (6,HP) bf16 / (1,HP) f32      projection
    wih/bx:      (HP,4HP) bf16 / (1,4HP) f32   input->gates, bx = bih + bhh
    whh:         (HP,4HP) bf16                 hidden->gates
    wout:        (1,HP) f32                    output head weights
    bout:        (1,1)  f32  in SMEM           output head bias
    out_ref:     (BC, T)     f32   sigmoid logits
    gx_scr:      (T*BC, 4HP) f32   precomputed input-side gate contributions
    """
    BC, T = out_ref.shape
    hp = whh_ref.shape[0]

    # ---- preamble: all input-side compute hoisted off the recurrence --------
    x = x_ref[...].astype(jnp.bfloat16)                            # (T*BC, 6)
    xp = jnp.maximum(
        jnp.dot(x, wp_ref[...], preferred_element_type=jnp.float32)
        + bp_ref[...], 0.0)                                        # (T*BC, HP)
    gx_scr[...] = (jnp.dot(xp.astype(jnp.bfloat16), wih_ref[...],
                           preferred_element_type=jnp.float32)
                   + bx_ref[...])                                  # (T*BC, 4HP)

    whh = whh_ref[...]                       # bf16, hoisted out of the loop
    wout = wout_ref[...]                     # (1, HP) f32

    # ---- recurrence: only h @ Whh (+ tiny out-head reduce) on the serial path
    h = jnp.zeros((BC, hp), jnp.float32)
    c = jnp.zeros((BC, hp), jnp.float32)
    pre_cols = []
    for t in range(T):                       # static small T -> full unroll
        gates = (gx_scr[t * BC:(t + 1) * BC, :]
                 + jnp.dot(h.astype(jnp.bfloat16), whh,
                           preferred_element_type=jnp.float32))    # (BC, 4HP)
        # PyTorch gate order i, f, g, o; each gate owns one 128-lane slot.
        i_g = jax.nn.sigmoid(gates[:, 0 * hp:1 * hp])
        f_g = jax.nn.sigmoid(gates[:, 1 * hp:2 * hp])
        g_g = jnp.tanh(gates[:, 2 * hp:3 * hp])
        o_g = jax.nn.sigmoid(gates[:, 3 * hp:4 * hp])
        c = f_g * c + i_g * g_g
        h = o_g * jnp.tanh(c)
        # folded output head: <h, wout>  (cross-lane reduce, XLU slot)
        pre_cols.append(jnp.sum(h * wout, axis=-1, keepdims=True))  # (BC, 1)

    # ---- epilogue: valid mask, bias, sigmoid, token mask, one store ---------
    pre = jnp.concatenate(pre_cols, axis=1)                         # (BC, T)
    t_idx = lax.broadcasted_iota(jnp.int32, (BC, T), 1)
    valid = (t_idx < lens_ref[...]).astype(jnp.float32)             # pad_packed
    pre = valid * pre + bout_ref[0, 0]
    sig = jax.nn.sigmoid(pre)
    # masked_fill(src_token_mask, -inf) then sigmoid  ==  0 where masked
    out_ref[...] = jnp.where(tokmask_ref[...] > 0.5, 0.0, sig)


def prepare_params(p):
    """Pad weights so each gate owns a 128-lane slot, pre-fold biases and
    cast matmul operands to bf16.  Call once and reuse across forward calls."""
    wp = jnp.zeros((F_IN, HP), jnp.float32).at[:, :H].set(p["wp"])
    bp = jnp.zeros((1, HP), jnp.float32).at[:, :H].set(p["bp"])
    wih = jnp.zeros((HP, 4 * HP), jnp.float32)
    whh = jnp.zeros((HP, 4 * HP), jnp.float32)
    bx = jnp.zeros((1, 4 * HP), jnp.float32)
    for k in range(4):
        wih = wih.at[:H, k * HP:k * HP + H].set(p["wih"][:, k * H:(k + 1) * H])
        whh = whh.at[:H, k * HP:k * HP + H].set(p["whh"][:, k * H:(k + 1) * H])
        bx = bx.at[:, k * HP:k * HP + H].set(
            p["bih"][:, k * H:(k + 1) * H] + p["bhh"][:, k * H:(k + 1) * H])
    wout = jnp.zeros((1, HP), jnp.float32).at[:, :H].set(p["wout"][:, 0][None, :])
    return {
        "wp": wp.astype(jnp.bfloat16), "bp": bp,
        "wih": wih.astype(jnp.bfloat16), "bx": bx,
        "whh": whh.astype(jnp.bfloat16),
        "wout": wout, "bout": p["bout"].astype(jnp.float32),   # (1, 1)
    }


def confidence_lstm_forward(examples, one_hot_type, examples_len,
                            src_token_mask, padded_params):
    """examples: (B,T,2) f32, one_hot_type: (B,T,4) f32, examples_len: (B,)
    int32, src_token_mask: (B,T) bool.  Returns (B,T) sigmoid logits
    (squeezed like the PyTorch module)."""
    B, T, _ = examples.shape
    Bp8 = ((B + 7) // 8) * 8
    BC = min(Bp8, 128)                       # batch rows per grid step
    Bp = ((B + BC - 1) // BC) * BC
    NB = Bp // BC                            # batch chunks (parallel grid axis)

    # glue: concat + batch pad + per-chunk time-major flatten
    x = jnp.concatenate([examples, one_hot_type], axis=-1).astype(jnp.float32)
    x = jnp.pad(x, ((0, Bp - B), (0, 0), (0, 0)))                  # (Bp, T, 6)
    x_tb = jnp.transpose(x.reshape(NB, BC, T, F_IN),
                         (0, 2, 1, 3)).reshape(NB, T * BC, F_IN)   # (NB,T*BC,6)

    lens = jnp.pad(examples_len.astype(jnp.int32),
                   (0, Bp - B)).reshape(NB, BC, 1)                 # (NB, BC, 1)
    tokmask = jnp.pad(src_token_mask.astype(jnp.float32),
                      ((0, Bp - B), (0, 0)),
                      constant_values=1.0).reshape(NB, BC, T)      # (NB, BC, T)

    pp = padded_params

    def _full(shape):
        nd = len(shape)
        return pl.BlockSpec(shape, lambda *_: (0,) * nd)           # whole array

    in_specs = [
        pl.BlockSpec((None, T * BC, F_IN), lambda b: (b, 0, 0)),   # x chunk
        pl.BlockSpec((None, BC, 1), lambda b: (b, 0, 0)),          # lens chunk
        pl.BlockSpec((None, BC, T), lambda b: (b, 0, 0)),          # mask chunk
        _full((F_IN, HP)),                                         # wp  (bf16)
        _full((1, HP)),                                            # bp
        _full((HP, 4 * HP)),                                       # wih (bf16)
        _full((1, 4 * HP)),                                        # bx
        _full((HP, 4 * HP)),                                       # whh (bf16)
        _full((1, HP)),                                            # wout
        pl.BlockSpec(memory_space=pltpu.MemorySpace.SMEM),         # bout scalar
    ]
    out_specs = pl.BlockSpec((None, BC, T), lambda b: (b, 0, 0))

    out_cb = pl.pallas_call(
        confidence_lstm_kernel,
        out_shape=jax.ShapeDtypeStruct((NB, BC, T), jnp.float32),
        grid=(NB,),
        in_specs=in_specs,
        out_specs=out_specs,
        scratch_shapes=[pltpu.VMEM((T * BC, 4 * HP), jnp.float32)],
        compiler_params=pltpu.CompilerParams(
            dimension_semantics=("parallel",),       # megacore over batch chunks
            vmem_limit_bytes=32 * 1024 * 1024),
    )(x_tb, lens, tokmask,
      pp["wp"], pp["bp"], pp["wih"], pp["bx"], pp["whh"],
      pp["wout"], pp["bout"])

    logit = out_cb.reshape(Bp, T)[:B]                              # (B, T)
    return jnp.squeeze(logit)


def reference_forward(examples, one_hot_type, examples_len, src_token_mask, p):
    """Pure-JAX f32 reference mirroring the PyTorch forward (unpadded weights)."""
    B, T, _ = examples.shape
    x = jnp.concatenate([examples, one_hot_type], axis=-1)
    xp = jax.nn.relu(x @ p["wp"] + p["bp"][0])                     # (B, T, 50)

    def cell(carry, x_t):
        h, c = carry
        gates = x_t @ p["wih"] + p["bih"][0] + h @ p["whh"] + p["bhh"][0]
        i = jax.nn.sigmoid(gates[:, 0 * H:1 * H])
        f = jax.nn.sigmoid(gates[:, 1 * H:2 * H])
        g = jnp.tanh(gates[:, 2 * H:3 * H])
        o = jax.nn.sigmoid(gates[:, 3 * H:4 * H])
        c = f * c + i * g
        h = o * jnp.tanh(c)
        return (h, c), h

    xs = jnp.transpose(xp, (1, 0, 2))
    _, hs = lax.scan(cell, (jnp.zeros((B, H)), jnp.zeros((B, H))), xs)
    hs = jnp.transpose(hs, (1, 0, 2))                              # (B, T, 50)

    valid = (jnp.arange(T)[None, :] < examples_len[:, None]).astype(jnp.float32)
    hs = hs * valid[..., None]
    pre = (hs @ p["wout"])[..., 0] + p["bout"][0, 0]               # (B, T)
    pre = jnp.where(src_token_mask, -jnp.inf, pre)
    return jnp.squeeze(jax.nn.sigmoid(pre))


def init_params(key):
    """Deterministic PyTorch-style uniform init (synthetic weights)."""
    ks = jax.random.split(key, 8)

    def u(k, shape, fan_in):
        b = 1.0 / np.sqrt(fan_in)
        return jax.random.uniform(k, shape, jnp.float32, -b, b)

    return {
        # project: Linear(6, 50)
        "wp":   u(ks[0], (F_IN, H), F_IN),
        "bp":   u(ks[1], (1, H), F_IN),
        # LSTM(50, 50): weights stored transposed for x @ W
        "wih":  u(ks[2], (H, 4 * H), H),
        "bih":  u(ks[3], (1, 4 * H), H),
        "whh":  u(ks[4], (H, 4 * H), H),
        "bhh":  u(ks[5], (1, 4 * H), H),
        # out: Linear(50, 1)
        "wout": u(ks[6], (H, 1), H),
        "bout": u(ks[7], (1, 1), H),
    }


if __name__ == "__main__":
    B, T = 2, 8
    key = jax.random.PRNGKey(0)
    k_par, k_ex, k_ty = jax.random.split(key, 3)

    params = init_params(k_par)
    padded_params = prepare_params(params)     # pad + bf16-cast once, reuse

    # examples: (B, T, 2) continuous features; one_hot_type: (B, T, 4) one-hot
    examples = jax.random.normal(k_ex, (B, T, 2), jnp.float32)
    type_ids = jax.random.randint(k_ty, (B, T), 0, 4)
    one_hot_type = jax.nn.one_hot(type_ids, 4, dtype=jnp.float32)

    examples_len = jnp.array([8, 5], dtype=jnp.int32)
    src_token_mask = jnp.arange(T)[None, :] >= examples_len[:, None]   # (B,T) bool

    out = confidence_lstm_forward(examples, one_hot_type, examples_len,
                                  src_token_mask, padded_params)
    out = jax.block_until_ready(out)

    ref = reference_forward(examples, one_hot_type, examples_len,
                            src_token_mask, params)
    ref = jax.block_until_ready(ref)

    # bf16 matmuls (f32 accumulate) vs f32 reference -> relaxed tolerance.
    np.testing.assert_allclose(np.asarray(out), np.asarray(ref),
                               rtol=2e-2, atol=2e-2)
    print("KERNEL_OK")
</pallas_src>

<mosaic_0001>
module attributes {stable_mosaic.version = 11 : i64} {
  func.func @confidence_lstm_kernel(%arg0: i32, %arg1: memref<1x64x6xf32, #tpu.memory_space<vmem>>, %arg2: memref<1x8x1xi32, #tpu.memory_space<vmem>>, %arg3: memref<1x8x8xf32, #tpu.memory_space<vmem>>, %arg4: memref<6x128xbf16, #tpu.memory_space<vmem>>, %arg5: memref<1x128xf32, #tpu.memory_space<vmem>>, %arg6: memref<128x512xbf16, #tpu.memory_space<vmem>>, %arg7: memref<1x512xf32, #tpu.memory_space<vmem>>, %arg8: memref<128x512xbf16, #tpu.memory_space<vmem>>, %arg9: memref<1x128xf32, #tpu.memory_space<vmem>>, %arg10: memref<1x1xf32, #tpu.memory_space<smem>>, %arg11: memref<1x8x8xf32, #tpu.memory_space<vmem>>, %arg12: memref<64x512xf32, #tpu.memory_space<vmem>>) attributes {dimension_semantics = [#tpu.dimension_semantics<parallel>], iteration_bounds = array<i64: 1>, scalar_prefetch = 0 : i64, scratch_operands = 1 : i64, tpu.core_type = #tpu.core_type<tc>, window_params = [{transform_indices = @transform_0, window_bounds = array<i64: 1, 64, 6>}, {transform_indices = @transform_1, window_bounds = array<i64: 1, 8, 1>}, {transform_indices = @transform_2, window_bounds = array<i64: 1, 8, 8>}, {pipeline_mode = #tpu.pipeline_mode<synchronous>, transform_indices = @transform_3, window_bounds = array<i64: 6, 128>}, {pipeline_mode = #tpu.pipeline_mode<synchronous>, transform_indices = @transform_4, window_bounds = array<i64: 1, 128>}, {pipeline_mode = #tpu.pipeline_mode<synchronous>, transform_indices = @transform_5, window_bounds = array<i64: 128, 512>}, {pipeline_mode = #tpu.pipeline_mode<synchronous>, transform_indices = @transform_6, window_bounds = array<i64: 1, 512>}, {pipeline_mode = #tpu.pipeline_mode<synchronous>, transform_indices = @transform_7, window_bounds = array<i64: 128, 512>}, {pipeline_mode = #tpu.pipeline_mode<synchronous>, transform_indices = @transform_8, window_bounds = array<i64: 1, 128>}, {transform_indices = @transform_9, window_bounds = array<i64: 1, 1>}, {transform_indices = @transform_10, window_bounds = array<i64: 1, 8, 8>}]} {
    %c0 = arith.constant 0 : index
    %c0_0 = arith.constant 0 : index
    %c0_1 = arith.constant 0 : index
    %0 = vector.load %arg1[%c0, %c0_0, %c0_1] : memref<1x64x6xf32, #tpu.memory_space<vmem>>, vector<1x64x6xf32>
    %1 = vector.shape_cast %0 : vector<1x64x6xf32> to vector<64x6xf32>
    %2 = arith.truncf %1 : vector<64x6xf32> to vector<64x6xbf16>
    %c0_2 = arith.constant 0 : index
    %c0_3 = arith.constant 0 : index
    %3 = vector.load %arg4[%c0_2, %c0_3] : memref<6x128xbf16, #tpu.memory_space<vmem>>, vector<6x128xbf16>
    %cst = arith.constant dense<0.000000e+00> : vector<64x128xf32>
    %4 = tpu.matmul %2, %3, %cst {dimension_numbers = #tpu.dot_dimension_numbers<[1], [0], [0], [1], [0, 0, 1, 1], [], []>} : vector<64x6xbf16>, vector<6x128xbf16>, vector<64x128xf32> -> vector<64x128xf32>
    %c0_4 = arith.constant 0 : index
    %c0_5 = arith.constant 0 : index
    %5 = vector.load %arg5[%c0_4, %c0_5] : memref<1x128xf32, #tpu.memory_space<vmem>>, vector<1x128xf32>
    %6 = vector.broadcast %5 : vector<1x128xf32> to vector<64x128xf32>
    %7 = arith.addf %4, %6 : vector<64x128xf32>
    %cst_6 = arith.constant 0.000000e+00 : f32
    %8 = vector.broadcast %cst_6 : f32 to vector<64x128xf32>
    %9 = arith.maximumf %7, %8 : vector<64x128xf32>
    %10 = arith.truncf %9 : vector<64x128xf32> to vector<64x128xbf16>
    %c0_7 = arith.constant 0 : index
    %c0_8 = arith.constant 0 : index
    %11 = vector.load %arg6[%c0_7, %c0_8] : memref<128x512xbf16, #tpu.memory_space<vmem>>, vector<128x512xbf16>
    %cst_9 = arith.constant dense<0.000000e+00> : vector<64x512xf32>
    %12 = tpu.matmul %10, %11, %cst_9 {dimension_numbers = #tpu.dot_dimension_numbers<[1], [0], [0], [1], [0, 0, 1, 1], [], []>} : vector<64x128xbf16>, vector<128x512xbf16>, vector<64x512xf32> -> vector<64x512xf32>
    %c0_10 = arith.constant 0 : index
    %c0_11 = arith.constant 0 : index
    %13 = vector.load %arg7[%c0_10, %c0_11] : memref<1x512xf32, #tpu.memory_space<vmem>>, vector<1x512xf32>
    %14 = vector.broadcast %13 : vector<1x512xf32> to vector<64x512xf32>
    %15 = arith.addf %12, %14 : vector<64x512xf32>
    %c0_12 = arith.constant 0 : index
    %c0_13 = arith.constant 0 : index
    %16 = vector.load %arg12[%c0_12, %c0_13] : memref<64x512xf32, #tpu.memory_space<vmem>>, vector<64x512xf32>
    tpu.vector_store %arg12[%c0_12, %c0_13], %15 {strides = array<i32>} : memref<64x512xf32, #tpu.memory_space<vmem>>, vector<64x512xf32>,
    %c0_14 = arith.constant 0 : index
    %c0_15 = arith.constant 0 : index
    %17 = vector.load %arg8[%c0_14, %c0_15] : memref<128x512xbf16, #tpu.memory_space<vmem>>, vector<128x512xbf16>
    %c0_16 = arith.constant 0 : index
    %c0_17 = arith.constant 0 : index
    %18 = vector.load %arg9[%c0_16, %c0_17] : memref<1x128xf32, #tpu.memory_space<vmem>>, vector<1x128xf32>
    %cst_18 = arith.constant 0.000000e+00 : f32
    %19 = vector.broadcast %cst_18 : f32 to vector<8x128xf32>
    %cst_19 = arith.constant 0.000000e+00 : f32
    %20 = vector.broadcast %cst_19 : f32 to vector<8x128xf32>
    %c0_20 = arith.constant 0 : index
    %c0_21 = arith.constant 0 : index
    %21 = vector.load %arg12[%c0_20, %c0_21] : memref<64x512xf32, #tpu.memory_space<vmem>>, vector<8x512xf32>
    %22 = arith.truncf %19 : vector<8x128xf32> to vector<8x128xbf16>
    %cst_22 = arith.constant dense<0.000000e+00> : vector<8x512xf32>
    %23 = tpu.matmul %22, %17, %cst_22 {dimension_numbers = #tpu.dot_dimension_numbers<[1], [0], [0], [1], [0, 0, 1, 1], [], []>} : vector<8x128xbf16>, vector<128x512xbf16>, vector<8x512xf32> -> vector<8x512xf32>
    %24 = arith.addf %21, %23 : vector<8x512xf32>
    %25 = vector.extract_strided_slice %24 {offsets = [0, 0], sizes = [8, 128], strides = [1, 1]} : vector<8x512xf32> to vector<8x128xf32>
    %26 = arith.negf %25 : vector<8x128xf32>
    %27 = math.exp %26 : vector<8x128xf32>
    %cst_23 = arith.constant 1.000000e+00 : f32
    %28 = vector.broadcast %cst_23 : f32 to vector<8x128xf32>
    %29 = arith.addf %28, %27 : vector<8x128xf32>
    %30 = arith.divf %28, %29 : vector<8x128xf32>
    %31 = vector.extract_strided_slice %24 {offsets = [0, 128], sizes = [8, 128], strides = [1, 1]} : vector<8x512xf32> to vector<8x128xf32>
    %32 = arith.negf %31 : vector<8x128xf32>
    %33 = math.exp %32 : vector<8x128xf32>
    %cst_24 = arith.constant 1.000000e+00 : f32
    %34 = vector.broadcast %cst_24 : f32 to vector<8x128xf32>
    %35 = arith.addf %34, %33 : vector<8x128xf32>
    %36 = arith.divf %34, %35 : vector<8x128xf32>
    %37 = vector.extract_strided_slice %24 {offsets = [0, 256], sizes = [8, 128], strides = [1, 1]} : vector<8x512xf32> to vector<8x128xf32>
    %38 = math.tanh %37 : vector<8x128xf32>
    %39 = vector.extract_strided_slice %24 {offsets = [0, 384], sizes = [8, 128], strides = [1, 1]} : vector<8x512xf32> to vector<8x128xf32>
    %40 = arith.negf %39 : vector<8x128xf32>
    %41 = math.exp %40 : vector<8x128xf32>
    %cst_25 = arith.constant 1.000000e+00 : f32
    %42 = vector.broadcast %cst_25 : f32 to vector<8x128xf32>
    %43 = arith.addf %42, %41 : vector<8x128xf32>
    %44 = arith.divf %42, %43 : vector<8x128xf32>
    %45 = arith.mulf %36, %20 : vector<8x128xf32>
    %46 = arith.mulf %30, %38 : vector<8x128xf32>
    %47 = arith.addf %45, %46 : vector<8x128xf32>
    %48 = math.tanh %47 : vector<8x128xf32>
    %49 = arith.mulf %44, %48 : vector<8x128xf32>
    %50 = vector.broadcast %18 : vector<1x128xf32> to vector<8x128xf32>
    %51 = arith.mulf %49, %50 : vector<8x128xf32>
    %cst_26 = arith.constant dense<0.000000e+00> : vector<8xf32>
    %52 = vector.multi_reduction <add>, %51, %cst_26 [1] : vector<8x128xf32> to vector<8xf32>
    %53 = vector.shape_cast %52 : vector<8xf32> to vector<8x1xf32>
    %c8 = arith.constant 8 : index
    %c0_27 = arith.constant 0 : index
    %54 = vector.load %arg12[%c8, %c0_27] : memref<64x512xf32, #tpu.memory_space<vmem>>, vector<8x512xf32>
    %55 = arith.truncf %49 : vector<8x128xf32> to vector<8x128xbf16>
    %cst_28 = arith.constant dense<0.000000e+00> : vector<8x512xf32>
    %56 = tpu.matmul %55, %17, %cst_28 {dimension_numbers = #tpu.dot_dimension_numbers<[1], [0], [0], [1], [0, 0, 1, 1], [], []>} : vector<8x128xbf16>, vector<128x512xbf16>, vector<8x512xf32> -> vector<8x512xf32>
    %57 = arith.addf %54, %56 : vector<8x512xf32>
    %58 = vector.extract_strided_slice %57 {offsets = [0, 0], sizes = [8, 128], strides = [1, 1]} : vector<8x512xf32> to vector<8x128xf32>
    %59 = arith.negf %58 : vector<8x128xf32>
    %60 = math.exp %59 : vector<8x128xf32>
    %cst_29 = arith.constant 1.000000e+00 : f32
    %61 = vector.broadcast %cst_29 : f32 to vector<8x128xf32>
    %62 = arith.addf %61, %60 : vector<8x128xf32>
    %63 = arith.divf %61, %62 : vector<8x128xf32>
    %64 = vector.extract_strided_slice %57 {offsets = [0, 128], sizes = [8, 128], strides = [1, 1]} : vector<8x512xf32> to vector<8x128xf32>
    %65 = arith.negf %64 : vector<8x128xf32>
    %66 = math.exp %65 : vector<8x128xf32>
    %cst_30 = arith.constant 1.000000e+00 : f32
    %67 = vector.broadcast %cst_30 : f32 to vector<8x128xf32>
    %68 = arith.addf %67, %66 : vector<8x128xf32>
    %69 = arith.divf %67, %68 : vector<8x128xf32>
    %70 = vector.extract_strided_slice %57 {offsets = [0, 256], sizes = [8, 128], strides = [1, 1]} : vector<8x512xf32> to vector<8x128xf32>
    %71 = math.tanh %70 : vector<8x128xf32>
    %72 = vector.extract_strided_slice %57 {offsets = [0, 384], sizes = [8, 128], strides = [1, 1]} : vector<8x512xf32> to vector<8x128xf32>
    %73 = arith.negf %72 : vector<8x128xf32>
    %74 = math.exp %73 : vector<8x128xf32>
    %cst_31 = arith.constant 1.000000e+00 : f32
    %75 = vector.broadcast %cst_31 : f32 to vector<8x128xf32>
    %76 = arith.addf %75, %74 : vector<8x128xf32>
    %77 = arith.divf %75, %76 : vector<8x128xf32>
    %78 = arith.mulf %69, %47 : vector<8x128xf32>
    %79 = arith.mulf %63, %71 : vector<8x128xf32>
    %80 = arith.addf %78, %79 : vector<8x128xf32>
    %81 = math.tanh %80 : vector<8x128xf32>
    %82 = arith.mulf %77, %81 : vector<8x128xf32>
    %83 = vector.broadcast %18 : vector<1x128xf32> to vector<8x128xf32>
    %84 = arith.mulf %82, %83 : vector<8x128xf32>
    %cst_32 = arith.constant dense<0.000000e+00> : vector<8xf32>
    %85 = vector.multi_reduction <add>, %84, %cst_32 [1] : vector<8x128xf32> to vector<8xf32>
    %86 = vector.shape_cast %85 : vector<8xf32> to vector<8x1xf32>
    %c16 = arith.constant 16 : index
    %c0_33 = arith.constant 0 : index
    %87 = vector.load %arg12[%c16, %c0_33] : memref<64x512xf32, #tpu.memory_space<vmem>>, vector<8x512xf32>
    %88 = arith.truncf %82 : vector<8x128xf32> to vector<8x128xbf16>
    %cst_34 = arith.constant dense<0.000000e+00> : vector<8x512xf32>
    %89 = tpu.matmul %88, %17, %cst_34 {dimension_numbers = #tpu.dot_dimension_numbers<[1], [0], [0], [1], [0, 0, 1, 1], [], []>} : vector<8x128xbf16>, vector<128x512xbf16>, vector<8x512xf32> -> vector<8x512xf32>
    %90 = arith.addf %87, %89 : vector<8x512xf32>
    %91 = vector.extract_strided_slice %90 {offsets = [0, 0], sizes = [8, 128], strides = [1, 1]} : vector<8x512xf32> to vector<8x128xf32>
    %92 = arith.negf %91 : vector<8x128xf32>
    %93 = math.exp %92 : vector<8x128xf32>
    %cst_35 = arith.constant 1.000000e+00 : f32
    %94 = vector.broadcast %cst_35 : f32 to vector<8x128xf32>
    %95 = arith.addf %94, %93 : vector<8x128xf32>
    %96 = arith.divf %94, %95 : vector<8x128xf32>
    %97 = vector.extract_strided_slice %90 {offsets = [0, 128], sizes = [8, 128], strides = [1, 1]} : vector<8x512xf32> to vector<8x128xf32>
    %98 = arith.negf %97 : vector<8x128xf32>
    %99 = math.exp %98 : vector<8x128xf32>
    %cst_36 = arith.constant 1.000000e+00 : f32
    %100 = vector.broadcast %cst_36 : f32 to vector<8x128xf32>
    %101 = arith.addf %100, %99 : vector<8x128xf32>
    %102 = arith.divf %100, %101 : vector<8x128xf32>
    %103 = vector.extract_strided_slice %90 {offsets = [0, 256], sizes = [8, 128], strides = [1, 1]} : vector<8x512xf32> to vector<8x128xf32>
    %104 = math.tanh %103 : vector<8x128xf32>
    %105 = vector.extract_strided_slice %90 {offsets = [0, 384], sizes = [8, 128], strides = [1, 1]} : vector<8x512xf32> to vector<8x128xf32>
    %106 = arith.negf %105 : vector<8x128xf32>
    %107 = math.exp %106 : vector<8x128xf32>
    %cst_37 = arith.constant 1.000000e+00 : f32
    %108 = vector.broadcast %cst_37 : f32 to vector<8x128xf32>
    %109 = arith.addf %108, %107 : vector<8x128xf32>
    %110 = arith.divf %108, %109 : vector<8x128xf32>
    %111 = arith.mulf %102, %80 : vector<8x128xf32>
    %112 = arith.mulf %96, %104 : vector<8x128xf32>
    %113 = arith.addf %111, %112 : vector<8x128xf32>
    %114 = math.tanh %113 : vector<8x128xf32>
    %115 = arith.mulf %110, %114 : vector<8x128xf32>
    %116 = vector.broadcast %18 : vector<1x128xf32> to vector<8x128xf32>
    %117 = arith.mulf %115, %116 : vector<8x128xf32>
    %cst_38 = arith.constant dense<0.000000e+00> : vector<8xf32>
    %118 = vector.multi_reduction <add>, %117, %cst_38 [1] : vector<8x128xf32> to vector<8xf32>
    %119 = vector.shape_cast %118 : vector<8xf32> to vector<8x1xf32>
    %c24 = arith.constant 24 : index
    %c0_39 = arith.constant 0 : index
    %120 = vector.load %arg12[%c24, %c0_39] : memref<64x512xf32, #tpu.memory_space<vmem>>, vector<8x512xf32>
    %121 = arith.truncf %115 : vector<8x128xf32> to vector<8x128xbf16>
    %cst_40 = arith.constant dense<0.000000e+00> : vector<8x512xf32>
    %122 = tpu.matmul %121, %17, %cst_40 {dimension_numbers = #tpu.dot_dimension_numbers<[1], [0], [0], [1], [0, 0, 1, 1], [], []>} : vector<8x128xbf16>, vector<128x512xbf16>, vector<8x512xf32> -> vector<8x512xf32>
    %123 = arith.addf %120, %122 : vector<8x512xf32>
    %124 = vector.extract_strided_slice %123 {offsets = [0, 0], sizes = [8, 128], strides = [1, 1]} : vector<8x512xf32> to vector<8x128xf32>
    %125 = arith.negf %124 : vector<8x128xf32>
    %126 = math.exp %125 : vector<8x128xf32>
    %cst_41 = arith.constant 1.000000e+00 : f32
    %127 = vector.broadcast %cst_41 : f32 to vector<8x128xf32>
    %128 = arith.addf %127, %126 : vector<8x128xf32>
    %129 = arith.divf %127, %128 : vector<8x128xf32>
    %130 = vector.extract_strided_slice %123 {offsets = [0, 128], sizes = [8, 128], strides = [1, 1]} : vector<8x512xf32> to vector<8x128xf32>
    %131 = arith.negf %130 : vector<8x128xf32>
    %132 = math.exp %131 : vector<8x128xf32>
    %cst_42 = arith.constant 1.000000e+00 : f32
    %133 = vector.broadcast %cst_42 : f32 to vector<8x128xf32>
    %134 = arith.addf %133, %132 : vector<8x128xf32>
    %135 = arith.divf %133, %134 : vector<8x128xf32>
    %136 = vector.extract_strided_slice %123 {offsets = [0, 256], sizes = [8, 128], strides = [1, 1]} : vector<8x512xf32> to vector<8x128xf32>
    %137 = math.tanh %136 : vector<8x128xf32>
    %138 = vector.extract_strided_slice %123 {offsets = [0, 384], sizes = [8, 128], strides = [1, 1]} : vector<8x512xf32> to vector<8x128xf32>
    %139 = arith.negf %138 : vector<8x128xf32>
    %140 = math.exp %139 : vector<8x128xf32>
    %cst_43 = arith.constant 1.000000e+00 : f32
    %141 = vector.broadcast %cst_43 : f32 to vector<8x128xf32>
    %142 = arith.addf %141, %140 : vector<8x128xf32>
    %143 = arith.divf %141, %142 : vector<8x128xf32>
    %144 = arith.mulf %135, %113 : vector<8x128xf32>
    %145 = arith.mulf %129, %137 : vector<8x128xf32>
    %146 = arith.addf %144, %145 : vector<8x128xf32>
    %147 = math.tanh %146 : vector<8x128xf32>
    %148 = arith.mulf %143, %147 : vector<8x128xf32>
    %149 = vector.broadcast %18 : vector<1x128xf32> to vector<8x128xf32>
    %150 = arith.mulf %148, %149 : vector<8x128xf32>
    %cst_44 = arith.constant dense<0.000000e+00> : vector<8xf32>
    %151 = vector.multi_reduction <add>, %150, %cst_44 [1] : vector<8x128xf32> to vector<8xf32>
    %152 = vector.shape_cast %151 : vector<8xf32> to vector<8x1xf32>
    %c32 = arith.constant 32 : index
    %c0_45 = arith.constant 0 : index
    %153 = vector.load %arg12[%c32, %c0_45] : memref<64x512xf32, #tpu.memory_space<vmem>>, vector<8x512xf32>
    %154 = arith.truncf %148 : vector<8x128xf32> to vector<8x128xbf16>
    %cst_46 = arith.constant dense<0.000000e+00> : vector<8x512xf32>
    %155 = tpu.matmul %154, %17, %cst_46 {dimension_numbers = #tpu.dot_dimension_numbers<[1], [0], [0], [1], [0, 0, 1, 1], [], []>} : vector<8x128xbf16>, vector<128x512xbf16>, vector<8x512xf32> -> vector<8x512xf32>
    %156 = arith.addf %153, %155 : vector<8x512xf32>
    %157 = vector.extract_strided_slice %156 {offsets = [0, 0], sizes = [8, 128], strides = [1, 1]} : vector<8x512xf32> to vector<8x128xf32>
    %158 = arith.negf %157 : vector<8x128xf32>
    %159 = math.exp %158 : vector<8x128xf32>
    %cst_47 = arith.constant 1.000000e+00 : f32
    %160 = vector.broadcast %cst_47 : f32 to vector<8x128xf32>
    %161 = arith.addf %160, %159 : vector<8x128xf32>
    %162 = arith.divf %160, %161 : vector<8x128xf32>
    %163 = vector.extract_strided_slice %156 {offsets = [0, 128], sizes = [8, 128], strides = [1, 1]} : vector<8x512xf32> to vector<8x128xf32>
    %164 = arith.negf %163 : vector<8x128xf32>
    %165 = math.exp %164 : vector<8x128xf32>
    %cst_48 = arith.constant 1.000000e+00 : f32
    %166 = vector.broadcast %cst_48 : f32 to vector<8x128xf32>
    %167 = arith.addf %166, %165 : vector<8x128xf32>
    %168 = arith.divf %166, %167 : vector<8x128xf32>
    %169 = vector.extract_strided_slice %156 {offsets = [0, 256], sizes = [8, 128], strides = [1, 1]} : vector<8x512xf32> to vector<8x128xf32>
    %170 = math.tanh %169 : vector<8x128xf32>
    %171 = vector.extract_strided_slice %156 {offsets = [0, 384], sizes = [8, 128], strides = [1, 1]} : vector<8x512xf32> to vector<8x128xf32>
    %172 = arith.negf %171 : vector<8x128xf32>
    %173 = math.exp %172 : vector<8x128xf32>
    %cst_49 = arith.constant 1.000000e+00 : f32
    %174 = vector.broadcast %cst_49 : f32 to vector<8x128xf32>
    %175 = arith.addf %174, %173 : vector<8x128xf32>
    %176 = arith.divf %174, %175 : vector<8x128xf32>
    %177 = arith.mulf %168, %146 : vector<8x128xf32>
    %178 = arith.mulf %162, %170 : vector<8x128xf32>
    %179 = arith.addf %177, %178 : vector<8x128xf32>
    %180 = math.tanh %179 : vector<8x128xf32>
    %181 = arith.mulf %176, %180 : vector<8x128xf32>
    %182 = vector.broadcast %18 : vector<1x128xf32> to vector<8x128xf32>
    %183 = arith.mulf %181, %182 : vector<8x128xf32>
    %cst_50 = arith.constant dense<0.000000e+00> : vector<8xf32>
    %184 = vector.multi_reduction <add>, %183, %cst_50 [1] : vector<8x128xf32> to vector<8xf32>
    %185 = vector.shape_cast %184 : vector<8xf32> to vector<8x1xf32>
    %c40 = arith.constant 40 : index
    %c0_51 = arith.constant 0 : index
    %186 = vector.load %arg12[%c40, %c0_51] : memref<64x512xf32, #tpu.memory_space<vmem>>, vector<8x512xf32>
    %187 = arith.truncf %181 : vector<8x128xf32> to vector<8x128xbf16>
    %cst_52 = arith.constant dense<0.000000e+00> : vector<8x512xf32>
    %188 = tpu.matmul %187, %17, %cst_52 {dimension_numbers = #tpu.dot_dimension_numbers<[1], [0], [0], [1], [0, 0, 1, 1], [], []>} : vector<8x128xbf16>, vector<128x512xbf16>, vector<8x512xf32> -> vector<8x512xf32>
    %189 = arith.addf %186, %188 : vector<8x512xf32>
    %190 = vector.extract_strided_slice %189 {offsets = [0, 0], sizes = [8, 128], strides = [1, 1]} : vector<8x512xf32> to vector<8x128xf32>
    %191 = arith.negf %190 : vector<8x128xf32>
    %192 = math.exp %191 : vector<8x128xf32>
    %cst_53 = arith.constant 1.000000e+00 : f32
    %193 = vector.broadcast %cst_53 : f32 to vector<8x128xf32>
    %194 = arith.addf %193, %192 : vector<8x128xf32>
    %195 = arith.divf %193, %194 : vector<8x128xf32>
    %196 = vector.extract_strided_slice %189 {offsets = [0, 128], sizes = [8, 128], strides = [1, 1]} : vector<8x512xf32> to vector<8x128xf32>
    %197 = arith.negf %196 : vector<8x128xf32>
    %198 = math.exp %197 : vector<8x128xf32>
    %cst_54 = arith.constant 1.000000e+00 : f32
    %199 = vector.broadcast %cst_54 : f32 to vector<8x128xf32>
    %200 = arith.addf %199, %198 : vector<8x128xf32>
    %201 = arith.divf %199, %200 : vector<8x128xf32>
    %202 = vector.extract_strided_slice %189 {offsets = [0, 256], sizes = [8, 128], strides = [1, 1]} : vector<8x512xf32> to vector<8x128xf32>
    %203 = math.tanh %202 : vector<8x128xf32>
    %204 = vector.extract_strided_slice %189 {offsets = [0, 384], sizes = [8, 128], strides = [1, 1]} : vector<8x512xf32> to vector<8x128xf32>
    %205 = arith.negf %204 : vector<8x128xf32>
    %206 = math.exp %205 : vector<8x128xf32>
    %cst_55 = arith.constant 1.000000e+00 : f32
    %207 = vector.broadcast %cst_55 : f32 to vector<8x128xf32>
    %208 = arith.addf %207, %206 : vector<8x128xf32>
    %209 = arith.divf %207, %208 : vector<8x128xf32>
    %210 = arith.mulf %201, %179 : vector<8x128xf32>
    %211 = arith.mulf %195, %203 : vector<8x128xf32>
    %212 = arith.addf %210, %211 : vector<8x128xf32>
    %213 = math.tanh %212 : vector<8x128xf32>
    %214 = arith.mulf %209, %213 : vector<8x128xf32>
    %215 = vector.broadcast %18 : vector<1x128xf32> to vector<8x128xf32>
    %216 = arith.mulf %214, %215 : vector<8x128xf32>
    %cst_56 = arith.constant dense<0.000000e+00> : vector<8xf32>
    %217 = vector.multi_reduction <add>, %216, %cst_56 [1] : vector<8x128xf32> to vector<8xf32>
    %218 = vector.shape_cast %217 : vector<8xf32> to vector<8x1xf32>
    %c48 = arith.constant 48 : index
    %c0_57 = arith.constant 0 : index
    %219 = vector.load %arg12[%c48, %c0_57] : memref<64x512xf32, #tpu.memory_space<vmem>>, vector<8x512xf32>
    %220 = arith.truncf %214 : vector<8x128xf32> to vector<8x128xbf16>
    %cst_58 = arith.constant dense<0.000000e+00> : vector<8x512xf32>
    %221 = tpu.matmul %220, %17, %cst_58 {dimension_numbers = #tpu.dot_dimension_numbers<[1], [0], [0], [1], [0, 0, 1, 1], [], []>} : vector<8x128xbf16>, vector<128x512xbf16>, vector<8x512xf32> -> vector<8x512xf32>
    %222 = arith.addf %219, %221 : vector<8x512xf32>
    %223 = vector.extract_strided_slice %222 {offsets = [0, 0], sizes = [8, 128], strides = [1, 1]} : vector<8x512xf32> to vector<8x128xf32>
    %224 = arith.negf %223 : vector<8x128xf32>
    %225 = math.exp %224 : vector<8x128xf32>
    %cst_59 = arith.constant 1.000000e+00 : f32
    %226 = vector.broadcast %cst_59 : f32 to vector<8x128xf32>
    %227 = arith.addf %226, %225 : vector<8x128xf32>
    %228 = arith.divf %226, %227 : vector<8x128xf32>
    %229 = vector.extract_strided_slice %222 {offsets = [0, 128], sizes = [8, 128], strides = [1, 1]} : vector<8x512xf32> to vector<8x128xf32>
    %230 = arith.negf %229 : vector<8x128xf32>
    %231 = math.exp %230 : vector<8x128xf32>
    %cst_60 = arith.constant 1.000000e+00 : f32
    %232 = vector.broadcast %cst_60 : f32 to vector<8x128xf32>
    %233 = arith.addf %232, %231 : vector<8x128xf32>
    %234 = arith.divf %232, %233 : vector<8x128xf32>
    %235 = vector.extract_strided_slice %222 {offsets = [0, 256], sizes = [8, 128], strides = [1, 1]} : vector<8x512xf32> to vector<8x128xf32>
    %236 = math.tanh %235 : vector<8x128xf32>
    %237 = vector.extract_strided_slice %222 {offsets = [0, 384], sizes = [8, 128], strides = [1, 1]} : vector<8x512xf32> to vector<8x128xf32>
    %238 = arith.negf %237 : vector<8x128xf32>
    %239 = math.exp %238 : vector<8x128xf32>
    %cst_61 = arith.constant 1.000000e+00 : f32
    %240 = vector.broadcast %cst_61 : f32 to vector<8x128xf32>
    %241 = arith.addf %240, %239 : vector<8x128xf32>
    %242 = arith.divf %240, %241 : vector<8x128xf32>
    %243 = arith.mulf %234, %212 : vector<8x128xf32>
    %244 = arith.mulf %228, %236 : vector<8x128xf32>
    %245 = arith.addf %243, %244 : vector<8x128xf32>
    %246 = math.tanh %245 : vector<8x128xf32>
    %247 = arith.mulf %242, %246 : vector<8x128xf32>
    %248 = vector.broadcast %18 : vector<1x128xf32> to vector<8x128xf32>
    %249 = arith.mulf %247, %248 : vector<8x128xf32>
    %cst_62 = arith.constant dense<0.000000e+00> : vector<8xf32>
    %250 = vector.multi_reduction <add>, %249, %cst_62 [1] : vector<8x128xf32> to vector<8xf32>
    %251 = vector.shape_cast %250 : vector<8xf32> to vector<8x1xf32>
    %c56 = arith.constant 56 : index
    %c0_63 = arith.constant 0 : index
    %252 = vector.load %arg12[%c56, %c0_63] : memref<64x512xf32, #tpu.memory_space<vmem>>, vector<8x512xf32>
    %253 = arith.truncf %247 : vector<8x128xf32> to vector<8x128xbf16>
    %cst_64 = arith.constant dense<0.000000e+00> : vector<8x512xf32>
    %254 = tpu.matmul %253, %17, %cst_64 {dimension_numbers = #tpu.dot_dimension_numbers<[1], [0], [0], [1], [0, 0, 1, 1], [], []>} : vector<8x128xbf16>, vector<128x512xbf16>, vector<8x512xf32> -> vector<8x512xf32>
    %255 = arith.addf %252, %254 : vector<8x512xf32>
    %256 = vector.extract_strided_slice %255 {offsets = [0, 0], sizes = [8, 128], strides = [1, 1]} : vector<8x512xf32> to vector<8x128xf32>
    %257 = arith.negf %256 : vector<8x128xf32>
    %258 = math.exp %257 : vector<8x128xf32>
    %cst_65 = arith.constant 1.000000e+00 : f32
    %259 = vector.broadcast %cst_65 : f32 to vector<8x128xf32>
    %260 = arith.addf %259, %258 : vector<8x128xf32>
    %261 = arith.divf %259, %260 : vector<8x128xf32>
    %262 = vector.extract_strided_slice %255 {offsets = [0, 128], sizes = [8, 128], strides = [1, 1]} : vector<8x512xf32> to vector<8x128xf32>
    %263 = arith.negf %262 : vector<8x128xf32>
    %264 = math.exp %263 : vector<8x128xf32>
    %cst_66 = arith.constant 1.000000e+00 : f32
    %265 = vector.broadcast %cst_66 : f32 to vector<8x128xf32>
    %266 = arith.addf %265, %264 : vector<8x128xf32>
    %267 = arith.divf %265, %266 : vector<8x128xf32>
    %268 = vector.extract_strided_slice %255 {offsets = [0, 256], sizes = [8, 128], strides = [1, 1]} : vector<8x512xf32> to vector<8x128xf32>
    %269 = math.tanh %268 : vector<8x128xf32>
    %270 = vector.extract_strided_slice %255 {offsets = [0, 384], sizes = [8, 128], strides = [1, 1]} : vector<8x512xf32> to vector<8x128xf32>
    %271 = arith.negf %270 : vector<8x128xf32>
    %272 = math.exp %271 : vector<8x128xf32>
    %cst_67 = arith.constant 1.000000e+00 : f32
    %273 = vector.broadcast %cst_67 : f32 to vector<8x128xf32>
    %274 = arith.addf %273, %272 : vector<8x128xf32>
    %275 = arith.divf %273, %274 : vector<8x128xf32>
    %276 = arith.mulf %267, %245 : vector<8x128xf32>
    %277 = arith.mulf %261, %269 : vector<8x128xf32>
    %278 = arith.addf %276, %277 : vector<8x128xf32>
    %279 = math.tanh %278 : vector<8x128xf32>
    %280 = arith.mulf %275, %279 : vector<8x128xf32>
    %281 = vector.broadcast %18 : vector<1x128xf32> to vector<8x128xf32>
    %282 = arith.mulf %280, %281 : vector<8x128xf32>
    %cst_68 = arith.constant dense<0.000000e+00> : vector<8xf32>
    %283 = vector.multi_reduction <add>, %282, %cst_68 [1] : vector<8x128xf32> to vector<8xf32>
    %284 = vector.shape_cast %283 : vector<8xf32> to vector<8x1xf32>
    %285 = tpu.concatenate %53, %86, %119, %152, %185, %218, %251, %284 in 1 : vector<8x1xf32>, vector<8x1xf32>, vector<8x1xf32>, vector<8x1xf32>, vector<8x1xf32>, vector<8x1xf32>, vector<8x1xf32>, vector<8x1xf32> -> vector<8x8xf32>
    %286 = tpu.iota {dimensions = array<i32: 1>} : vector<8x8xi32>
    %c0_69 = arith.constant 0 : index
    %c0_70 = arith.constant 0 : index
    %c0_71 = arith.constant 0 : index
    %287 = vector.load %arg2[%c0_69, %c0_70, %c0_71] : memref<1x8x1xi32, #tpu.memory_space<vmem>>, vector<1x8x1xi32>
    %288 = vector.shape_cast %287 : vector<1x8x1xi32> to vector<8x1xi32>
    %289 = vector.broadcast %288 : vector<8x1xi32> to vector<8x8xi32>
    %290 = arith.cmpi slt, %286, %289 : vector<8x8xi32>
    %291 = arith.extui %290 : vector<8x8xi1> to vector<8x8xi32>
    %292 = arith.sitofp %291 : vector<8x8xi32> to vector<8x8xf32>
    %293 = arith.mulf %292, %285 : vector<8x8xf32>
    %c0_72 = arith.constant 0 : index
    %c0_73 = arith.constant 0 : index
    %294 = memref.load %arg10[%c0_72, %c0_73] : memref<1x1xf32, #tpu.memory_space<smem>>
    %295 = vector.broadcast %294 : f32 to vector<8x8xf32>
    %296 = arith.addf %293, %295 : vector<8x8xf32>
    %297 = arith.negf %296 : vector<8x8xf32>
    %298 = math.exp %297 : vector<8x8xf32>
    %cst_74 = arith.constant 1.000000e+00 : f32
    %299 = vector.broadcast %cst_74 : f32 to vector<8x8xf32>
    %300 = arith.addf %299, %298 : vector<8x8xf32>
    %301 = arith.divf %299, %300 : vector<8x8xf32>
    %c0_75 = arith.constant 0 : index
    %c0_76 = arith.constant 0 : index
    %c0_77 = arith.constant 0 : index
    %302 = vector.load %arg3[%c0_75, %c0_76, %c0_77] : memref<1x8x8xf32, #tpu.memory_space<vmem>>, vector<1x8x8xf32>
    %303 = vector.shape_cast %302 : vector<1x8x8xf32> to vector<8x8xf32>
    %cst_78 = arith.constant 5.000000e-01 : f32
    %304 = vector.broadcast %cst_78 : f32 to vector<8x8xf32>
    %305 = arith.cmpf ogt, %303, %304 : vector<8x8xf32>
    %cst_79 = arith.constant 0.000000e+00 : f32
    %306 = vector.broadcast %cst_79 : f32 to vector<8x8xf32>
    %307 = arith.select %305, %306, %301 : vector<8x8xi1>, vector<8x8xf32>
    %c0_80 = arith.constant 0 : index
    %c0_81 = arith.constant 0 : index
    %c0_82 = arith.constant 0 : index
    %308 = vector.load %arg11[%c0_80, %c0_81, %c0_82] : memref<1x8x8xf32, #tpu.memory_space<vmem>>, vector<1x8x8xf32>
    %309 = vector.shape_cast %308 : vector<1x8x8xf32> to vector<8x8xf32>
    %310 = vector.shape_cast %307 : vector<8x8xf32> to vector<1x8x8xf32>
    tpu.vector_store %arg11[%c0_80, %c0_81, %c0_82], %310 {strides = array<i32>} : memref<1x8x8xf32, #tpu.memory_space<vmem>>, vector<1x8x8xf32>,
    return
  }
  func.func @transform_0(%arg0: i32) -> (i32, i32, i32) {
    %c0_i32 = arith.constant 0 : i32
    %c0_i32_0 = arith.constant 0 : i32
    %c0_i32_1 = arith.constant 0 : i32
    return %arg0, %c0_i32, %c0_i32_0 : i32, i32, i32
  }
  func.func @transform_1(%arg0: i32) -> (i32, i32, i32) {
    %c0_i32 = arith.constant 0 : i32
    %c0_i32_0 = arith.constant 0 : i32
    %c0_i32_1 = arith.constant 0 : i32
    return %arg0, %c0_i32, %c0_i32_0 : i32, i32, i32
  }
  func.func @transform_2(%arg0: i32) -> (i32, i32, i32) {
    %c0_i32 = arith.constant 0 : i32
    %c0_i32_0 = arith.constant 0 : i32
    %c0_i32_1 = arith.constant 0 : i32
    return %arg0, %c0_i32, %c0_i32_0 : i32, i32, i32
  }
  func.func @transform_3(%arg0: i32) -> (i32, i32) {
    %c0_i32 = arith.constant 0 : i32
    %c0_i32_0 = arith.constant 0 : i32
    %c0_i32_1 = arith.constant 0 : i32
    return %c0_i32, %c0_i32_0 : i32, i32
  }
  func.func @transform_4(%arg0: i32) -> (i32, i32) {
    %c0_i32 = arith.constant 0 : i32
    %c0_i32_0 = arith.constant 0 : i32
    %c0_i32_1 = arith.constant 0 : i32
    return %c0_i32, %c0_i32_0 : i32, i32
  }
  func.func @transform_5(%arg0: i32) -> (i32, i32) {
    %c0_i32 = arith.constant 0 : i32
    %c0_i32_0 = arith.constant 0 : i32
    %c0_i32_1 = arith.constant 0 : i32
    return %c0_i32, %c0_i32_0 : i32, i32
  }
  func.func @transform_6(%arg0: i32) -> (i32, i32) {
    %c0_i32 = arith.constant 0 : i32
    %c0_i32_0 = arith.constant 0 : i32
    %c0_i32_1 = arith.constant 0 : i32
    return %c0_i32, %c0_i32_0 : i32, i32
  }
  func.func @transform_7(%arg0: i32) -> (i32, i32) {
    %c0_i32 = arith.constant 0 : i32
    %c0_i32_0 = arith.constant 0 : i32
    %c0_i32_1 = arith.constant 0 : i32
    return %c0_i32, %c0_i32_0 : i32, i32
  }
  func.func @transform_8(%arg0: i32) -> (i32, i32) {
    %c0_i32 = arith.constant 0 : i32
    %c0_i32_0 = arith.constant 0 : i32
    %c0_i32_1 = arith.constant 0 : i32
    return %c0_i32, %c0_i32_0 : i32, i32
  }
  func.func @transform_9(%arg0: i32) -> (i32, i32) {
    %c0_i32 = arith.constant 0 : i32
    %c0_i32_0 = arith.constant 0 : i32
    %c0_i32_1 = arith.constant 0 : i32
    return %c0_i32, %c0_i32_0 : i32, i32
  }
  func.func @transform_10(%arg0: i32) -> (i32, i32, i32) {
    %c0_i32 = arith.constant 0 : i32
    %c0_i32_0 = arith.constant 0 : i32
    %c0_i32_1 = arith.constant 0 : i32
    return %arg0, %c0_i32, %c0_i32_0 : i32, i32, i32
  }
}

</mosaic_0001>

<llo_original>
// kernel: tpu_custom_call.1
$region0: #{tpu_custom_call.1}
  #allocation0 [shape = 'u32[]', space=smem, size = 0x4, offset = 0x4, fixed_abs, tag = 'smem constant byte address 0x4 - core index']
  #allocation1 [shape = 'u32[144,128]{1,0:T(1,128)}', space=vmem, size = 0x12000, scoped, tag = 'internal scratch']
  #allocation2 [shape = 'f32[64,512]{1,0:T(8,128)}', space=vmem, size = 0x20000, scoped, tag = 'scratch operand']
  #allocation3 [shape = 'f32[1,1]{1,0:T(1,128)S(6)}', space=smem, size = 0x200, scoped, tag = 'scoped memory for tpu_custom_call.1']
  %s0 = inlined_call_operand.vmem [shape: f32[1,64,6], index: 0, kind: input, shape index: {}]
  %s1 = inlined_call_operand.vmem [shape: s32[1,8,1], index: 1, kind: input, shape index: {}]
  %s2 = inlined_call_operand.vmem [shape: f32[1,8,8], index: 2, kind: input, shape index: {}]
  %s3 = inlined_call_operand.vmem [shape: bf16[6,128], index: 3, kind: input, shape index: {}]
  %s4 = inlined_call_operand.vmem [shape: f32[1,128], index: 4, kind: input, shape index: {}]
  %s5 = inlined_call_operand.hbm [shape: bf16[128,512], index: 5, kind: input, shape index: {}]
  %s6 = inlined_call_operand.vmem [shape: f32[1,512], index: 6, kind: input, shape index: {}]
  %s7 = inlined_call_operand.hbm [shape: bf16[128,512], index: 7, kind: input, shape index: {}]
  %s8 = inlined_call_operand.vmem [shape: f32[1,128], index: 8, kind: input, shape index: {}]
  %s9 = inlined_call_operand.<no memory space> [shape: f32[1,1], index: 9, kind: input, shape index: {}]
  %s10 = inlined_call_operand.hbm [shape: f32[1,8,8], index: 10, kind: output, shape index: {}]
  %s11 = sld [smem:[#allocation0]]
  $region58: #{tpu_custom_call.1} parent=0
    _
  %s13 = ssub.s32 1, %s11
  %s14 = scalar_select 0, %s13, %s11
  %15 = sst [smem:[#allocation3]] %s9
  $region1: #{tpu_custom_call.1} parent=0
    #allocation4 [shape = 'u8[131072]{0}', space=vmem, size = 0x20000, scoped, tag = 'input window, operand 5, single buffered']
    #allocation5 [shape = 's32[1]{0}', space=sflag, size = 0x4, scoped, tag = 'scoped memory for tpu_custom_call.1']
    #allocation6 [shape = 's32[1]{0}', space=sflag, size = 0x4, scoped, tag = 'scoped memory for tpu_custom_call.1']
    #allocation7 [shape = 'u8[131072]{0}', space=vmem, size = 0x20000, scoped, tag = 'input window, operand 7, single buffered']
    #allocation8 [shape = 's32[1]{0}', space=sflag, size = 0x4, scoped, tag = 'scoped memory for tpu_custom_call.1']
    #allocation9 [shape = 'u8[4096]{0}', space=vmem, size = 0x1000, scoped, tag = 'output window, operand 0, single buffered']
    %16 = vsyncpa [#allocation5], 0
    %17 = vsyncpa [#allocation8], 0
    %18 = vsyncpa [#allocation6], 0
    // Predicated region
    $region2: #{tpu_custom_call.1} parent=1 // pred_check
      _
    $region3: #{tpu_custom_call.1} parent=1 // pred_check_branch
      %20 = sbr.rel (0) target = $region5
    $region4: #{tpu_custom_call.1} parent=1 // pred_region
      _
    $region5: #{tpu_custom_call.1} parent=1 // pred_fallthru
      _
    // Predicated region
    $region6: #{tpu_custom_call.1} parent=1 // pred_check
      _
    $region7: #{tpu_custom_call.1} parent=1 // pred_check_branch
      %22 = sbr.rel (0) target = $region9
    $region8: #{tpu_custom_call.1} parent=1 // pred_region
      _
    $region9: #{tpu_custom_call.1} parent=1 // pred_fallthru
      _
    // Predicated region
    $region10: #{tpu_custom_call.1} parent=1 // pred_check
      _
    $region11: #{tpu_custom_call.1} parent=1 // pred_check_branch
      %24 = sbr.rel (0) target = $region13
    $region12: #{tpu_custom_call.1} parent=1 // pred_region
      _
    $region13: #{tpu_custom_call.1} parent=1 // pred_fallthru
      _
    // Predicated region
    $region14: #{tpu_custom_call.1} parent=1 // pred_check
      _
    $region15: #{tpu_custom_call.1} parent=1 // pred_check_branch
      %26 = sbr.rel (0) target = $region17
    $region16: #{tpu_custom_call.1} parent=1 // pred_region
      _
    $region17: #{tpu_custom_call.1} parent=1 // pred_fallthru
      _
    // Predicated region
    $region18: #{tpu_custom_call.1} parent=1 // pred_check
      _
    $region19: #{tpu_custom_call.1} parent=1 // pred_check_branch
      %28 = sbr.rel (0) target = $region21
    $region20: #{tpu_custom_call.1} parent=1 // pred_region
      _
    $region21: #{tpu_custom_call.1} parent=1 // pred_fallthru
      _
    // Predicated region
    $region22: #{tpu_custom_call.1} parent=1 // pred_check
      _
    $region23: #{tpu_custom_call.1} parent=1 // pred_check_branch
      %30 = sbr.rel (0) target = $region25
    $region24: #{tpu_custom_call.1} parent=1 // pred_region
      %s32 = ssub.s32 4096, 4096
      %33 = vsyncadd [#allocation5], %s32
      %s34 = sshll.u32 [#allocation4], 4
      %s35 = int_to_ptr.vmem [resolvable:$true] %s34
      %40 = dma.hbm_to_vmem [thread:$0]  %s5, 4096, %s35, [#allocation5], 256, 256, 16
    $region25: #{tpu_custom_call.1} parent=1 // pred_fallthru
      _
    // Predicated region
    $region26: #{tpu_custom_call.1} parent=1 // pred_check
      _
    $region27: #{tpu_custom_call.1} parent=1 // pred_check_branch
      %42 = sbr.rel (0) target = $region29
    $region28: #{tpu_custom_call.1} parent=1 // pred_region
      _
    $region29: #{tpu_custom_call.1} parent=1 // pred_fallthru
      _
    // Predicated region
    $region30: #{tpu_custom_call.1} parent=1 // pred_check
      _
    $region31: #{tpu_custom_call.1} parent=1 // pred_check_branch
      %44 = sbr.rel (0) target = $region33
    $region32: #{tpu_custom_call.1} parent=1 // pred_region
      %s46 = ssub.s32 4096, 4096
      %47 = vsyncadd [#allocation8], %s46
      %s48 = sshll.u32 [#allocation7], 4
      %s49 = int_to_ptr.vmem [resolvable:$true] %s48
      %54 = dma.hbm_to_vmem [thread:$0]  %s7, 4096, %s49, [#allocation8], 256, 256, 16
    $region33: #{tpu_custom_call.1} parent=1 // pred_fallthru
      _
    // Predicated region
    $region34: #{tpu_custom_call.1} parent=1 // pred_check
      _
    $region35: #{tpu_custom_call.1} parent=1 // pred_check_branch
      %56 = sbr.rel (0) target = $region37
    $region36: #{tpu_custom_call.1} parent=1 // pred_region
      _
    $region37: #{tpu_custom_call.1} parent=1 // pred_fallthru
      _
    // Predicated region
    $region38: #{tpu_custom_call.1} parent=1 // pred_check
      _
    $region39: #{tpu_custom_call.1} parent=1 // pred_check_branch
      %58 = sbr.rel (0) target = $region41
    $region40: #{tpu_custom_call.1} parent=1 // pred_region
      _
    $region41: #{tpu_custom_call.1} parent=1 // pred_fallthru
      _
    // Predicated region
    $region42: #{tpu_custom_call.1} parent=1 // pred_check
      _
    $region43: #{tpu_custom_call.1} parent=1 // pred_check_branch
      %60 = sbr.rel (0) target = $region45
    $region44: #{tpu_custom_call.1} parent=1 // pred_region
      %61 = dma.done [#allocation5], 4096
    $region45: #{tpu_custom_call.1} parent=1 // pred_fallthru
      _
    // Predicated region
    $region46: #{tpu_custom_call.1} parent=1 // pred_check
      _
    $region47: #{tpu_custom_call.1} parent=1 // pred_check_branch
      %63 = sbr.rel (0) target = $region49
    $region48: #{tpu_custom_call.1} parent=1 // pred_region
      %64 = dma.done [#allocation8], 4096
    $region49: #{tpu_custom_call.1} parent=1 // pred_fallthru
      _
    %v66 = vld [vmem:[%s0] sm:$0xff]
    %v67 = vld [vmem:[%s0 + $0x8] sm:$0xff]
    %v68 = vld [vmem:[%s0 + $0x10] sm:$0xff]
    %v69 = vld [vmem:[%s0 + $0x18] sm:$0xff]
    %v70 = vld [vmem:[%s0 + $0x20] sm:$0xff]
    %v71 = vld [vmem:[%s0 + $0x28] sm:$0xff]
    %v72 = vld [vmem:[%s0 + $0x30] sm:$0xff]
    %v73 = vld [vmem:[%s0 + $0x38] sm:$0xff]
    %v74 = vpack.c.bf16 %v67, %v66
    %v75 = vpack.c.bf16 %v69, %v68
    %v76 = vpack.c.bf16 %v71, %v70
    %v77 = vpack.c.bf16 %v73, %v72
    %v78 = vld [vmem:[%s3] sm:$0x7]
    %v79 = vld [vmem:[%s4] sm:$0x1]
    %v81 = vlaneseq
    %v82 = vshrl.u32 %v81, 7
    %v83 = vsub.s32 0, %v82
    %v84 = vrot.slane %v79, %v83
    %vm86 = vcmask 48128
    %v88 = vsel %vm86, %v74, 0
    %v91 = vsel %vm86, %v75, 0
    %v94 = vsel %vm86, %v76, 0
    %v97 = vsel %vm86, %v77, 0
    %vm99 = vcmask 1042432
    %v101 = vsel %vm99, %v78, 0
    %103 = vmatprep.subr.bf16.mxu0 0
    %104 = vmatpush1.bf16.msra.mxu0 0
    %105 = vmatprep.subr.bf16.mxu0 0
    %106 = vmatpush1.bf16.msra.mxu0 0
    %107 = vmatprep.subr.bf16.mxu0 0
    %108 = vmatpush1.bf16.msra.mxu0 0
    %109 = vmatprep.subr.bf16.mxu0 0
    %110 = vmatpush1.bf16.msra.mxu0 0
    %111 = vmatprep.subr.bf16.mxu0 0
    %112 = vmatpush1.bf16.msra.mxu0 0
    %113 = vmatprep.subr.bf16.mxu0 0
    %114 = vmatpush1.bf16.msra.mxu0 0
    %115 = vmatprep.subr.bf16.mxu0 0
    %116 = vmatpush1.bf16.msra.mxu0 0
    %117 = vmatprep.subr.bf16.mxu0 0
    %118 = vmatpush1.bf16.msra.mxu0 %v101
    %119 = vmatprep.subr.bf16.mxu0 0
    %120 = vmatpush2.bf16.msra.mxu0 0
    %121 = vmatprep.subr.bf16.mxu0 0
    %122 = vmatpush2.bf16.msra.mxu0 0
    %123 = vmatprep.subr.bf16.mxu0 0
    %124 = vmatpush2.bf16.msra.mxu0 0
    %125 = vmatprep.subr.bf16.mxu0 0
    %126 = vmatpush2.bf16.msra.mxu0 0
    %127 = vmatprep.subr.bf16.mxu0 0
    %128 = vmatpush2.bf16.msra.mxu0 0
    %129 = vmatprep.subr.bf16.mxu0 0
    %130 = vmatpush2.bf16.msra.mxu0 0
    %131 = vmatprep.subr.bf16.mxu0 0
    %132 = vmatpush2.bf16.msra.mxu0 0
    %133 = vmatprep.subr.bf16.mxu0 0
    %134 = vmatpush2.bf16.msra.mxu0 0
    %135 = vmatprep.mubr.bf16.mxu0 0
    %136 = vmatmul.mubr.bf16.gmra.mxu0 %v88
    %v137 = vpop.f32.mrf.mxu0
    %v138 = vadd.f32 %v84, %v137
    %v139 = vpop.f32.mrf.mxu0
    %v140 = vpop.f32.mrf.mxu0
    %v141 = vadd.f32 %v84, %v140
    %v142 = vpop.f32.mrf.mxu0
    %143 = vmatprep.mubr.bf16.mxu0 0
    %144 = vmatmul.mubr.bf16.gmra.mxu0 %v91
    %v145 = vpop.f32.mrf.mxu0
    %v146 = vadd.f32 %v84, %v145
    %v147 = vpop.f32.mrf.mxu0
    %v148 = vpop.f32.mrf.mxu0
    %v149 = vadd.f32 %v84, %v148
    %v150 = vpop.f32.mrf.mxu0
    %151 = vmatprep.mubr.bf16.mxu0 0
    %152 = vmatmul.mubr.bf16.gmra.mxu0 %v94
    %v153 = vpop.f32.mrf.mxu0
    %v154 = vadd.f32 %v84, %v153
    %v155 = vpop.f32.mrf.mxu0
    %v156 = vpop.f32.mrf.mxu0
    %v157 = vadd.f32 %v84, %v156
    %v158 = vpop.f32.mrf.mxu0
    %159 = vmatprep.mubr.bf16.mxu0 0
    %160 = vmatmul.mubr.bf16.gmra.mxu0 %v97
    %v161 = vpop.f32.mrf.mxu0
    %v162 = vadd.f32 %v84, %v161
    %v163 = vpop.f32.mrf.mxu0
    %v164 = vpop.f32.mrf.mxu0
    %v165 = vadd.f32 %v84, %v164
    %v166 = vpop.f32.mrf.mxu0
    %167 = vdwg.mxu0
    %v168 = vmax.f32 %v138, 0.0
    %v169 = vmax.f32 %v141, 0.0
    %v170 = vmax.f32 %v146, 0.0
    %v171 = vmax.f32 %v149, 0.0
    %v172 = vmax.f32 %v154, 0.0
    %v173 = vmax.f32 %v157, 0.0
    %v174 = vmax.f32 %v162, 0.0
    %v175 = vmax.f32 %v165, 0.0
    %v176 = vpack.c.bf16 %v169, %v168
    %v177 = vpack.c.bf16 %v171, %v170
    %v178 = vpack.c.bf16 %v173, %v172
    %v179 = vpack.c.bf16 %v175, %v174
    %v180 = vld [vmem:[#allocation4] sm:$0xff]
    %v181 = vld [vmem:[#allocation4 + $0x8] sm:$0xff]
    %v182 = vld [vmem:[#allocation4 + $0x10] sm:$0xff]
    %v183 = vld [vmem:[#allocation4 + $0x18] sm:$0xff]
    %v184 = vld [vmem:[#allocation4 + $0x20] sm:$0xff]
    %v185 = vld [vmem:[#allocation4 + $0x28] sm:$0xff]
    %v186 = vld [vmem:[#allocation4 + $0x30] sm:$0xff]
    %v187 = vld [vmem:[#allocation4 + $0x38] sm:$0xff]
    %v188 = vld [vmem:[#allocation4 + $0x40] sm:$0xff]
    %v189 = vld [vmem:[#allocation4 + $0x48] sm:$0xff]
    %v190 = vld [vmem:[#allocation4 + $0x50] sm:$0xff]
    %v191 = vld [vmem:[#allocation4 + $0x58] sm:$0xff]
    %v192 = vld [vmem:[#allocation4 + $0x60] sm:$0xff]
    %v193 = vld [vmem:[#allocation4 + $0x68] sm:$0xff]
    %v194 = vld [vmem:[#allocation4 + $0x70] sm:$0xff]
    %v195 = vld [vmem:[#allocation4 + $0x78] sm:$0xff]
    %v196 = vld [vmem:[#allocation4 + $0x80] sm:$0xff]
    %v197 = vld [vmem:[#allocation4 + $0x88] sm:$0xff]
    %v198 = vld [vmem:[#allocation4 + $0x90] sm:$0xff]
    %v199 = vld [vmem:[#allocation4 + $0x98] sm:$0xff]
    %v200 = vld [vmem:[#allocation4 + $0xa0] sm:$0xff]
    %v201 = vld [vmem:[#allocation4 + $0xa8] sm:$0xff]
    %v202 = vld [vmem:[#allocation4 + $0xb0] sm:$0xff]
    %v203 = vld [vmem:[#allocation4 + $0xb8] sm:$0xff]
    %v204 = vld [vmem:[#allocation4 + $0xc0] sm:$0xff]
    %v205 = vld [vmem:[#allocation4 + $0xc8] sm:$0xff]
    %v206 = vld [vmem:[#allocation4 + $0xd0] sm:$0xff]
    %v207 = vld [vmem:[#allocation4 + $0xd8] sm:$0xff]
    %v208 = vld [vmem:[#allocation4 + $0xe0] sm:$0xff]
    %v209 = vld [vmem:[#allocation4 + $0xe8] sm:$0xff]
    %v210 = vld [vmem:[#allocation4 + $0xf0] sm:$0xff]
    %v211 = vld [vmem:[#allocation4 + $0xf8] sm:$0xff]
    %v212 = vld [vmem:[%s6] sm:$0xf]
    %v214 = vlaneseq
    %v215 = vshrl.u32 %v214, 7
    %v216 = vsub.s32 0, %v215
    %v217 = vrot.slane %v212, %v216
    %v218 = vlaneseq
    %v219 = vshrl.u32 %v218, 7
    %v220 = vsub.s32 1, %v219
    %v221 = vrot.slane %v212, %v220
    %v222 = vlaneseq
    %v223 = vshrl.u32 %v222, 7
    %v224 = vsub.s32 2, %v223
    %v225 = vrot.slane %v212, %v224
    %v226 = vlaneseq
    %v227 = vshrl.u32 %v226, 7
    %v228 = vsub.s32 3, %v227
    %v229 = vrot.slane %v212, %v228
    %v266 = vunpack.c.l.b16 %v180
    %v267 = vunpack.c.h.b16 %v180
    %v268 = vunpack.c.l.b16 %v181
    %v269 = vunpack.c.h.b16 %v181
    %v270 = vunpack.c.l.b16 %v182
    %v271 = vunpack.c.h.b16 %v182
    %v272 = vunpack.c.l.b16 %v183
    %v273 = vunpack.c.h.b16 %v183
    %v274 = vunpack.c.l.b16 %v184
    %v275 = vunpack.c.h.b16 %v184
    %v276 = vunpack.c.l.b16 %v185
    %v277 = vunpack.c.h.b16 %v185
    %v278 = vunpack.c.l.b16 %v186
    %v279 = vunpack.c.h.b16 %v186
    %v280 = vunpack.c.l.b16 %v187
    %v281 = vunpack.c.h.b16 %v187
    %v282 = vunpack.c.l.b16 %v188
    %v283 = vunpack.c.h.b16 %v188
    %v284 = vunpack.c.l.b16 %v189
    %v285 = vunpack.c.h.b16 %v189
    %v286 = vunpack.c.l.b16 %v190
    %v287 = vunpack.c.h.b16 %v190
    %v288 = vunpack.c.l.b16 %v191
    %v289 = vunpack.c.h.b16 %v191
    %v290 = vunpack.c.l.b16 %v192
    %v291 = vunpack.c.h.b16 %v192
    %v292 = vunpack.c.l.b16 %v193
    %v293 = vunpack.c.h.b16 %v193
    %v294 = vunpack.c.l.b16 %v194
    %v295 = vunpack.c.h.b16 %v194
    %v296 = vunpack.c.l.b16 %v195
    %v297 = vunpack.c.h.b16 %v195
    %v298 = vunpack.c.l.b16 %v196
    %v299 = vunpack.c.h.b16 %v196
    %v300 = vunpack.c.l.b16 %v197
    %v301 = vunpack.c.h.b16 %v197
    %v302 = vunpack.c.l.b16 %v198
    %v303 = vunpack.c.h.b16 %v198
    %v304 = vunpack.c.l.b16 %v199
    %v305 = vunpack.c.h.b16 %v199
    %v306 = vunpack.c.l.b16 %v200
    %v307 = vunpack.c.h.b16 %v200
    %v308 = vunpack.c.l.b16 %v201
    %v309 = vunpack.c.h.b16 %v201
    %v310 = vunpack.c.l.b16 %v202
    %v311 = vunpack.c.h.b16 %v202
    %v312 = vunpack.c.l.b16 %v203
    %v313 = vunpack.c.h.b16 %v203
    %v314 = vunpack.c.l.b16 %v204
    %v315 = vunpack.c.h.b16 %v204
    %v316 = vunpack.c.l.b16 %v205
    %v317 = vunpack.c.h.b16 %v205
    %v318 = vunpack.c.l.b16 %v206
    %v319 = vunpack.c.h.b16 %v206
    %v320 = vunpack.c.l.b16 %v207
    %v321 = vunpack.c.h.b16 %v207
    %v322 = vunpack.c.l.b16 %v208
    %v323 = vunpack.c.h.b16 %v208
    %v324 = vunpack.c.l.b16 %v209
    %v325 = vunpack.c.h.b16 %v209
    %v326 = vunpack.c.l.b16 %v210
    %v327 = vunpack.c.h.b16 %v210
    %v328 = vunpack.c.l.b16 %v211
    %v329 = vunpack.c.h.b16 %v211
    %v330 = vpack.c.b16 %v270, %v266
    %v331 = vpack.c.b16 %v271, %v267
    %v332 = vpack.c.b16 %v272, %v268
    %v333 = vpack.c.b16 %v273, %v269
    %v334 = vpack.c.b16 %v278, %v274
    %v335 = vpack.c.b16 %v279, %v275
    %v336 = vpack.c.b16 %v280, %v276
    %v337 = vpack.c.b16 %v281, %v277
    %v338 = vpack.c.b16 %v286, %v282
    %v339 = vpack.c.b16 %v287, %v283
    %v340 = vpack.c.b16 %v288, %v284
    %v341 = vpack.c.b16 %v289, %v285
    %v342 = vpack.c.b16 %v294, %v290
    %v343 = vpack.c.b16 %v295, %v291
    %v344 = vpack.c.b16 %v296, %v292
    %v345 = vpack.c.b16 %v297, %v293
    %v346 = vpack.c.b16 %v302, %v298
    %v347 = vpack.c.b16 %v303, %v299
    %v348 = vpack.c.b16 %v304, %v300
    %v349 = vpack.c.b16 %v305, %v301
    %v350 = vpack.c.b16 %v310, %v306
    %v351 = vpack.c.b16 %v311, %v307
    %v352 = vpack.c.b16 %v312, %v308
    %v353 = vpack.c.b16 %v313, %v309
    %v354 = vpack.c.b16 %v318, %v314
    %v355 = vpack.c.b16 %v319, %v315
    %v356 = vpack.c.b16 %v320, %v316
    %v357 = vpack.c.b16 %v321, %v317
    %v358 = vpack.c.b16 %v326, %v322
    %v359 = vpack.c.b16 %v327, %v323
    %v360 = vpack.c.b16 %v328, %v324
    %v361 = vpack.c.b16 %v329, %v325
    %394 = vmatprep.subr.bf16.mxu0 %v359
    %395 = vmatpush1.bf16.msra.mxu0 %v358
    %396 = vmatprep.subr.bf16.mxu0 %v355
    %397 = vmatpush1.bf16.msra.mxu0 %v354
    %398 = vmatprep.subr.bf16.mxu0 %v351
    %399 = vmatpush1.bf16.msra.mxu0 %v350
    %400 = vmatprep.subr.bf16.mxu0 %v347
    %401 = vmatpush1.bf16.msra.mxu0 %v346
    %402 = vmatprep.subr.bf16.mxu0 %v343
    %403 = vmatpush1.bf16.msra.mxu0 %v342
    %404 = vmatprep.subr.bf16.mxu0 %v339
    %405 = vmatpush1.bf16.msra.mxu0 %v338
    %406 = vmatprep.subr.bf16.mxu0 %v335
    %407 = vmatpush1.bf16.msra.mxu0 %v334
    %408 = vmatprep.subr.bf16.mxu0 %v331
    %409 = vmatpush1.bf16.msra.mxu0 %v330
    %410 = vmatprep.subr.bf16.mxu0 0
    %411 = vmatpush2.bf16.msra.mxu0 0
    %412 = vmatprep.subr.bf16.mxu0 0
    %413 = vmatpush2.bf16.msra.mxu0 0
    %414 = vmatprep.subr.bf16.mxu0 0
    %415 = vmatpush2.bf16.msra.mxu0 0
    %416 = vmatprep.subr.bf16.mxu0 0
    %417 = vmatpush2.bf16.msra.mxu0 0
    %418 = vmatprep.subr.bf16.mxu0 0
    %419 = vmatpush2.bf16.msra.mxu0 0
    %420 = vmatprep.subr.bf16.mxu0 0
    %421 = vmatpush2.bf16.msra.mxu0 0
    %422 = vmatprep.subr.bf16.mxu0 0
    %423 = vmatpush2.bf16.msra.mxu0 0
    %424 = vmatprep.subr.bf16.mxu0 0
    %425 = vmatpush2.bf16.msra.mxu0 0
    %426 = vmatprep.mubr.bf16.mxu0 0
    %427 = vmatmul.mubr.bf16.gmra.mxu0 %v176
    %v428 = vpop.f32.mrf.mxu0
    %v429 = vadd.f32 %v217, %v428
    %v430 = vpop.f32.mrf.mxu0
    %v431 = vadd.f32 %v221, %v430
    %v432 = vpop.f32.mrf.mxu0
    %v433 = vadd.f32 %v217, %v432
    %v434 = vpop.f32.mrf.mxu0
    %v435 = vadd.f32 %v221, %v434
    %436 = vmatprep.mubr.bf16.mxu0 0
    %437 = vmatmul.mubr.bf16.gmra.mxu0 %v177
    %v438 = vpop.f32.mrf.mxu0
    %v439 = vadd.f32 %v217, %v438
    %v440 = vpop.f32.mrf.mxu0
    %v441 = vadd.f32 %v221, %v440
    %v442 = vpop.f32.mrf.mxu0
    %v443 = vadd.f32 %v217, %v442
    %v444 = vpop.f32.mrf.mxu0
    %v445 = vadd.f32 %v221, %v444
    %446 = vmatprep.mubr.bf16.mxu0 0
    %447 = vmatmul.mubr.bf16.gmra.mxu0 %v178
    %v448 = vpop.f32.mrf.mxu0
    %v449 = vadd.f32 %v217, %v448
    %v450 = vpop.f32.mrf.mxu0
    %v451 = vadd.f32 %v221, %v450
    %v452 = vpop.f32.mrf.mxu0
    %v453 = vadd.f32 %v217, %v452
    %v454 = vpop.f32.mrf.mxu0
    %v455 = vadd.f32 %v221, %v454
    %456 = vmatprep.mubr.bf16.mxu0 0
    %457 = vmatmul.mubr.bf16.gmra.mxu0 %v179
    %v458 = vpop.f32.mrf.mxu0
    %v459 = vadd.f32 %v217, %v458
    %v460 = vpop.f32.mrf.mxu0
    %v461 = vadd.f32 %v221, %v460
    %v462 = vpop.f32.mrf.mxu0
    %v463 = vadd.f32 %v217, %v462
    %v464 = vpop.f32.mrf.mxu0
    %v465 = vadd.f32 %v221, %v464
    %466 = vdwg.mxu0
    %467 = vmatprep.subr.bf16.mxu0 %v361
    %468 = vmatpush1.bf16.msra.mxu0 %v360
    %469 = vmatprep.subr.bf16.mxu0 %v357
    %470 = vmatpush1.bf16.msra.mxu0 %v356
    %471 = vmatprep.subr.bf16.mxu0 %v353
    %472 = vmatpush1.bf16.msra.mxu0 %v352
    %473 = vmatprep.subr.bf16.mxu0 %v349
    %474 = vmatpush1.bf16.msra.mxu0 %v348
    %475 = vmatprep.subr.bf16.mxu0 %v345
    %476 = vmatpush1.bf16.msra.mxu0 %v344
    %477 = vmatprep.subr.bf16.mxu0 %v341
    %478 = vmatpush1.bf16.msra.mxu0 %v340
    %479 = vmatprep.subr.bf16.mxu0 %v337
    %480 = vmatpush1.bf16.msra.mxu0 %v336
    %481 = vmatprep.subr.bf16.mxu0 %v333
    %482 = vmatpush1.bf16.msra.mxu0 %v332
    %483 = vmatprep.subr.bf16.mxu0 0
    %484 = vmatpush2.bf16.msra.mxu0 0
    %485 = vmatprep.subr.bf16.mxu0 0
    %486 = vmatpush2.bf16.msra.mxu0 0
    %487 = vmatprep.subr.bf16.mxu0 0
    %488 = vmatpush2.bf16.msra.mxu0 0
    %489 = vmatprep.subr.bf16.mxu0 0
    %490 = vmatpush2.bf16.msra.mxu0 0
    %491 = vmatprep.subr.bf16.mxu0 0
    %492 = vmatpush2.bf16.msra.mxu0 0
    %493 = vmatprep.subr.bf16.mxu0 0
    %494 = vmatpush2.bf16.msra.mxu0 0
    %495 = vmatprep.subr.bf16.mxu0 0
    %496 = vmatpush2.bf16.msra.mxu0 0
    %497 = vmatprep.subr.bf16.mxu0 0
    %498 = vmatpush2.bf16.msra.mxu0 0
    %499 = vmatprep.mubr.bf16.mxu0 0
    %500 = vmatmul.mubr.bf16.gmra.mxu0 %v176
    %v501 = vpop.f32.mrf.mxu0
    %v502 = vadd.f32 %v225, %v501
    %v503 = vpop.f32.mrf.mxu0
    %v504 = vadd.f32 %v229, %v503
    %v505 = vpop.f32.mrf.mxu0
    %v506 = vadd.f32 %v225, %v505
    %v507 = vpop.f32.mrf.mxu0
    %v508 = vadd.f32 %v229, %v507
    %509 = vmatprep.mubr.bf16.mxu0 0
    %510 = vmatmul.mubr.bf16.gmra.mxu0 %v177
    %v511 = vpop.f32.mrf.mxu0
    %v512 = vadd.f32 %v225, %v511
    %v513 = vpop.f32.mrf.mxu0
    %v514 = vadd.f32 %v229, %v513
    %v515 = vpop.f32.mrf.mxu0
    %v516 = vadd.f32 %v225, %v515
    %v517 = vpop.f32.mrf.mxu0
    %v518 = vadd.f32 %v229, %v517
    %519 = vmatprep.mubr.bf16.mxu0 0
    %520 = vmatmul.mubr.bf16.gmra.mxu0 %v178
    %v521 = vpop.f32.mrf.mxu0
    %v522 = vadd.f32 %v225, %v521
    %v523 = vpop.f32.mrf.mxu0
    %v524 = vadd.f32 %v229, %v523
    %v525 = vpop.f32.mrf.mxu0
    %v526 = vadd.f32 %v225, %v525
    %v527 = vpop.f32.mrf.mxu0
    %v528 = vadd.f32 %v229, %v527
    %529 = vmatprep.mubr.bf16.mxu0 0
    %530 = vmatmul.mubr.bf16.gmra.mxu0 %v179
    %v531 = vpop.f32.mrf.mxu0
    %v532 = vadd.f32 %v225, %v531
    %v533 = vpop.f32.mrf.mxu0
    %v534 = vadd.f32 %v229, %v533
    %v535 = vpop.f32.mrf.mxu0
    %v536 = vadd.f32 %v225, %v535
    %v537 = vpop.f32.mrf.mxu0
    %v538 = vadd.f32 %v229, %v537
    %539 = vdwg.mxu0
    %540 = vst [vmem:[#allocation2] sm:$0xff] %v429
    %541 = vst [vmem:[#allocation2 + $0x8] sm:$0xff] %v431
    %542 = vst [vmem:[#allocation2 + $0x10] sm:$0xff] %v502
    %543 = vst [vmem:[#allocation2 + $0x18] sm:$0xff] %v504
    %544 = vst [vmem:[#allocation2 + $0x20] sm:$0xff] %v433
    %545 = vst [vmem:[#allocation2 + $0x28] sm:$0xff] %v435
    %546 = vst [vmem:[#allocation2 + $0x30] sm:$0xff] %v506
    %547 = vst [vmem:[#allocation2 + $0x38] sm:$0xff] %v508
    %548 = vst [vmem:[#allocation2 + $0x40] sm:$0xff] %v439
    %549 = vst [vmem:[#allocation2 + $0x48] sm:$0xff] %v441
    %550 = vst [vmem:[#allocation2 + $0x50] sm:$0xff] %v512
    %551 = vst [vmem:[#allocation2 + $0x58] sm:$0xff] %v514
    %552 = vst [vmem:[#allocation2 + $0x60] sm:$0xff] %v443
    %553 = vst [vmem:[#allocation2 + $0x68] sm:$0xff] %v445
    %554 = vst [vmem:[#allocation2 + $0x70] sm:$0xff] %v516
    %555 = vst [vmem:[#allocation2 + $0x78] sm:$0xff] %v518
    %556 = vst [vmem:[#allocation2 + $0x80] sm:$0xff] %v449
    %557 = vst [vmem:[#allocation2 + $0x88] sm:$0xff] %v451
    %558 = vst [vmem:[#allocation2 + $0x90] sm:$0xff] %v522
    %559 = vst [vmem:[#allocation2 + $0x98] sm:$0xff] %v524
    %560 = vst [vmem:[#allocation2 + $0xa0] sm:$0xff] %v453
    %561 = vst [vmem:[#allocation2 + $0xa8] sm:$0xff] %v455
    %562 = vst [vmem:[#allocation2 + $0xb0] sm:$0xff] %v526
    %563 = vst [vmem:[#allocation2 + $0xb8] sm:$0xff] %v528
    %564 = vst [vmem:[#allocation2 + $0xc0] sm:$0xff] %v459
    %565 = vst [vmem:[#allocation2 + $0xc8] sm:$0xff] %v461
    %566 = vst [vmem:[#allocation2 + $0xd0] sm:$0xff] %v532
    %567 = vst [vmem:[#allocation2 + $0xd8] sm:$0xff] %v534
    %568 = vst [vmem:[#allocation2 + $0xe0] sm:$0xff] %v463
    %569 = vst [vmem:[#allocation2 + $0xe8] sm:$0xff] %v465
    %570 = vst [vmem:[#allocation2 + $0xf0] sm:$0xff] %v536
    %571 = vst [vmem:[#allocation2 + $0xf8] sm:$0xff] %v538
    %v572 = vld [vmem:[#allocation7] sm:$0xff]
    %v573 = vld [vmem:[#allocation7 + $0x8] sm:$0xff]
    %v574 = vld [vmem:[#allocation7 + $0x10] sm:$0xff]
    %v575 = vld [vmem:[#allocation7 + $0x18] sm:$0xff]
    %v576 = vld [vmem:[#allocation7 + $0x20] sm:$0xff]
    %v577 = vld [vmem:[#allocation7 + $0x28] sm:$0xff]
    %v578 = vld [vmem:[#allocation7 + $0x30] sm:$0xff]
    %v579 = vld [vmem:[#allocation7 + $0x38] sm:$0xff]
    %v580 = vld [vmem:[#allocation7 + $0x40] sm:$0xff]
    %v581 = vld [vmem:[#allocation7 + $0x48] sm:$0xff]
    %v582 = vld [vmem:[#allocation7 + $0x50] sm:$0xff]
    %v583 = vld [vmem:[#allocation7 + $0x58] sm:$0xff]
    %v584 = vld [vmem:[#allocation7 + $0x60] sm:$0xff]
    %v585 = vld [vmem:[#allocation7 + $0x68] sm:$0xff]
    %v586 = vld [vmem:[#allocation7 + $0x70] sm:$0xff]
    %v587 = vld [vmem:[#allocation7 + $0x78] sm:$0xff]
    %v588 = vld [vmem:[#allocation7 + $0x80] sm:$0xff]
    %v589 = vld [vmem:[#allocation7 + $0x88] sm:$0xff]
    %v590 = vld [vmem:[#allocation7 + $0x90] sm:$0xff]
    %v591 = vld [vmem:[#allocation7 + $0x98] sm:$0xff]
    %v592 = vld [vmem:[#allocation7 + $0xa0] sm:$0xff]
    %v593 = vld [vmem:[#allocation7 + $0xa8] sm:$0xff]
    %v594 = vld [vmem:[#allocation7 + $0xb0] sm:$0xff]
    %v595 = vld [vmem:[#allocation7 + $0xb8] sm:$0xff]
    %v596 = vld [vmem:[#allocation7 + $0xc0] sm:$0xff]
    %v597 = vld [vmem:[#allocation7 + $0xc8] sm:$0xff]
    %v598 = vld [vmem:[#allocation7 + $0xd0] sm:$0xff]
    %v599 = vld [vmem:[#allocation7 + $0xd8] sm:$0xff]
    %v600 = vld [vmem:[#allocation7 + $0xe0] sm:$0xff]
    %v601 = vld [vmem:[#allocation7 + $0xe8] sm:$0xff]
    %v602 = vld [vmem:[#allocation7 + $0xf0] sm:$0xff]
    %v603 = vld [vmem:[#allocation7 + $0xf8] sm:$0xff]
    %v604 = vld [vmem:[%s8] sm:$0x1]
    %v605 = vld [vmem:[#allocation2] sm:$0xff]
    %v606 = vld [vmem:[#allocation2 + $0x8] sm:$0xff]
    %v607 = vld [vmem:[#allocation2 + $0x10] sm:$0xff]
    %v608 = vld [vmem:[#allocation2 + $0x18] sm:$0xff]
    %v641 = vunpack.c.l.b16 %v572
    %v642 = vunpack.c.h.b16 %v572
    %v643 = vunpack.c.l.b16 %v573
    %v644 = vunpack.c.h.b16 %v573
    %v645 = vunpack.c.l.b16 %v574
    %v646 = vunpack.c.h.b16 %v574
    %v647 = vunpack.c.l.b16 %v575
    %v648 = vunpack.c.h.b16 %v575
    %v649 = vunpack.c.l.b16 %v576
    %v650 = vunpack.c.h.b16 %v576
    %v651 = vunpack.c.l.b16 %v577
    %v652 = vunpack.c.h.b16 %v577
    %v653 = vunpack.c.l.b16 %v578
    %v654 = vunpack.c.h.b16 %v578
    %v655 = vunpack.c.l.b16 %v579
    %v656 = vunpack.c.h.b16 %v579
    %v657 = vunpack.c.l.b16 %v580
    %v658 = vunpack.c.h.b16 %v580
    %v659 = vunpack.c.l.b16 %v581
    %v660 = vunpack.c.h.b16 %v581
    %v661 = vunpack.c.l.b16 %v582
    %v662 = vunpack.c.h.b16 %v582
    %v663 = vunpack.c.l.b16 %v583
    %v664 = vunpack.c.h.b16 %v583
    %v665 = vunpack.c.l.b16 %v584
    %v666 = vunpack.c.h.b16 %v584
    %v667 = vunpack.c.l.b16 %v585
    %v668 = vunpack.c.h.b16 %v585
    %v669 = vunpack.c.l.b16 %v586
    %v670 = vunpack.c.h.b16 %v586
    %v671 = vunpack.c.l.b16 %v587
    %v672 = vunpack.c.h.b16 %v587
    %v673 = vunpack.c.l.b16 %v588
    %v674 = vunpack.c.h.b16 %v588
    %v675 = vunpack.c.l.b16 %v589
    %v676 = vunpack.c.h.b16 %v589
    %v677 = vunpack.c.l.b16 %v590
    %v678 = vunpack.c.h.b16 %v590
    %v679 = vunpack.c.l.b16 %v591
    %v680 = vunpack.c.h.b16 %v591
    %v681 = vunpack.c.l.b16 %v592
    %v682 = vunpack.c.h.b16 %v592
    %v683 = vunpack.c.l.b16 %v593
    %v684 = vunpack.c.h.b16 %v593
    %v685 = vunpack.c.l.b16 %v594
    %v686 = vunpack.c.h.b16 %v594
    %v687 = vunpack.c.l.b16 %v595
    %v688 = vunpack.c.h.b16 %v595
    %v689 = vunpack.c.l.b16 %v596
    %v690 = vunpack.c.h.b16 %v596
    %v691 = vunpack.c.l.b16 %v597
    %v692 = vunpack.c.h.b16 %v597
    %v693 = vunpack.c.l.b16 %v598
    %v694 = vunpack.c.h.b16 %v598
    %v695 = vunpack.c.l.b16 %v599
    %v696 = vunpack.c.h.b16 %v599
    %v697 = vunpack.c.l.b16 %v600
    %v698 = vunpack.c.h.b16 %v600
    %v699 = vunpack.c.l.b16 %v601
    %v700 = vunpack.c.h.b16 %v601
    %v701 = vunpack.c.l.b16 %v602
    %v702 = vunpack.c.h.b16 %v602
    %v703 = vunpack.c.l.b16 %v603
    %v704 = vunpack.c.h.b16 %v603
    %v705 = vpack.c.b16 %v645, %v641
    %v706 = vpack.c.b16 %v646, %v642
    %v707 = vpack.c.b16 %v647, %v643
    %v708 = vpack.c.b16 %v648, %v644
    %v709 = vpack.c.b16 %v653, %v649
    %v710 = vpack.c.b16 %v654, %v650
    %v711 = vpack.c.b16 %v655, %v651
    %v712 = vpack.c.b16 %v656, %v652
    %v713 = vpack.c.b16 %v661, %v657
    %v714 = vpack.c.b16 %v662, %v658
    %v715 = vpack.c.b16 %v663, %v659
    %v716 = vpack.c.b16 %v664, %v660
    %v717 = vpack.c.b16 %v669, %v665
    %v718 = vpack.c.b16 %v670, %v666
    %v719 = vpack.c.b16 %v671, %v667
    %v720 = vpack.c.b16 %v672, %v668
    %v721 = vpack.c.b16 %v677, %v673
    %v722 = vpack.c.b16 %v678, %v674
    %v723 = vpack.c.b16 %v679, %v675
    %v724 = vpack.c.b16 %v680, %v676
    %v725 = vpack.c.b16 %v685, %v681
    %v726 = vpack.c.b16 %v686, %v682
    %v727 = vpack.c.b16 %v687, %v683
    %v728 = vpack.c.b16 %v688, %v684
    %v729 = vpack.c.b16 %v693, %v689
    %v730 = vpack.c.b16 %v694, %v690
    %v731 = vpack.c.b16 %v695, %v691
    %v732 = vpack.c.b16 %v696, %v692
    %v733 = vpack.c.b16 %v701, %v697
    %v734 = vpack.c.b16 %v702, %v698
    %v735 = vpack.c.b16 %v703, %v699
    %v736 = vpack.c.b16 %v704, %v700
    %769 = vmatprep.subr.bf16.mxu0 %v734
    %770 = vmatpush1.bf16.msra.mxu0 %v733
    %771 = vmatprep.subr.bf16.mxu0 %v730
    %772 = vmatpush1.bf16.msra.mxu0 %v729
    %773 = vmatprep.subr.bf16.mxu0 %v726
    %774 = vmatpush1.bf16.msra.mxu0 %v725
    %775 = vmatprep.subr.bf16.mxu0 %v722
    %776 = vmatpush1.bf16.msra.mxu0 %v721
    %777 = vmatprep.subr.bf16.mxu0 %v718
    %778 = vmatpush1.bf16.msra.mxu0 %v717
    %779 = vmatprep.subr.bf16.mxu0 %v714
    %780 = vmatpush1.bf16.msra.mxu0 %v713
    %781 = vmatprep.subr.bf16.mxu0 %v710
    %782 = vmatpush1.bf16.msra.mxu0 %v709
    %783 = vmatprep.subr.bf16.mxu0 %v706
    %784 = vmatpush1.bf16.msra.mxu0 %v705
    %785 = vmatprep.subr.bf16.mxu0 0
    %786 = vmatpush2.bf16.msra.mxu0 0
    %787 = vmatprep.subr.bf16.mxu0 0
    %788 = vmatpush2.bf16.msra.mxu0 0
    %789 = vmatprep.subr.bf16.mxu0 0
    %790 = vmatpush2.bf16.msra.mxu0 0
    %791 = vmatprep.subr.bf16.mxu0 0
    %792 = vmatpush2.bf16.msra.mxu0 0
    %793 = vmatprep.subr.bf16.mxu0 0
    %794 = vmatpush2.bf16.msra.mxu0 0
    %795 = vmatprep.subr.bf16.mxu0 0
    %796 = vmatpush2.bf16.msra.mxu0 0
    %797 = vmatprep.subr.bf16.mxu0 0
    %798 = vmatpush2.bf16.msra.mxu0 0
    %799 = vmatprep.subr.bf16.mxu0 0
    %800 = vmatpush2.bf16.msra.mxu0 0
    %801 = vmatprep.mubr.bf16.mxu0 0
    %802 = vmatmul.mubr.bf16.gmra.mxu0 0
    %v803 = vpop.f32.mrf.mxu0
    %v804 = vadd.f32 0.0, %v803
    %v805 = vpop.f32.mrf.mxu0
    %v806 = vadd.f32 0.0, %v805
    %v807 = vpop.f32.mrf.mxu0
    %v808 = vpop.f32.mrf.mxu0
    %809 = vdwg.mxu0
    %810 = vmatprep.subr.bf16.mxu0 %v736
    %811 = vmatpush1.bf16.msra.mxu0 %v735
    %812 = vmatprep.subr.bf16.mxu0 %v732
    %813 = vmatpush1.bf16.msra.mxu0 %v731
    %814 = vmatprep.subr.bf16.mxu0 %v728
    %815 = vmatpush1.bf16.msra.mxu0 %v727
    %816 = vmatprep.subr.bf16.mxu0 %v724
    %817 = vmatpush1.bf16.msra.mxu0 %v723
    %818 = vmatprep.subr.bf16.mxu0 %v720
    %819 = vmatpush1.bf16.msra.mxu0 %v719
    %820 = vmatprep.subr.bf16.mxu0 %v716
    %821 = vmatpush1.bf16.msra.mxu0 %v715
    %822 = vmatprep.subr.bf16.mxu0 %v712
    %823 = vmatpush1.bf16.msra.mxu0 %v711
    %824 = vmatprep.subr.bf16.mxu0 %v708
    %825 = vmatpush1.bf16.msra.mxu0 %v707
    %826 = vmatprep.subr.bf16.mxu0 0
    %827 = vmatpush2.bf16.msra.mxu0 0
    %828 = vmatprep.subr.bf16.mxu0 0
    %829 = vmatpush2.bf16.msra.mxu0 0
    %830 = vmatprep.subr.bf16.mxu0 0
    %831 = vmatpush2.bf16.msra.mxu0 0
    %832 = vmatprep.subr.bf16.mxu0 0
    %833 = vmatpush2.bf16.msra.mxu0 0
    %834 = vmatprep.subr.bf16.mxu0 0
    %835 = vmatpush2.bf16.msra.mxu0 0
    %836 = vmatprep.subr.bf16.mxu0 0
    %837 = vmatpush2.bf16.msra.mxu0 0
    %838 = vmatprep.subr.bf16.mxu0 0
    %839 = vmatpush2.bf16.msra.mxu0 0
    %840 = vmatprep.subr.bf16.mxu0 0
    %841 = vmatpush2.bf16.msra.mxu0 0
    %842 = vmatprep.mubr.bf16.mxu0 0
    %843 = vmatmul.mubr.bf16.gmra.mxu0 0
    %v844 = vpop.f32.mrf.mxu0
    %v845 = vadd.f32 0.0, %v844
    %v846 = vpop.f32.mrf.mxu0
    %v847 = vadd.f32 0.0, %v846
    %v848 = vpop.f32.mrf.mxu0
    %v849 = vpop.f32.mrf.mxu0
    %850 = vdwg.mxu0
    %v851 = vadd.f32 %v605, %v804
    %v852 = vadd.f32 %v606, %v806
    %v853 = vadd.f32 %v607, %v845
    %v854 = vadd.f32 %v608, %v847
    %v855 = vxor.u32 %v851, 2147483648
    %v856 = vmul.f32 %v855, 1.442695
    %v857 = vpow.pop %v856
    %v858 = vadd.f32 %v857, 1.0
    %v859 = vrcp.pop %v858
    %v860 = vmul.f32 1.0, %v859
    %v861 = vxor.u32 %v852, 2147483648
    %v862 = vmul.f32 %v861, 1.442695
    %v863 = vpow.pop %v862
    %v864 = vadd.f32 %v863, 1.0
    %v865 = vrcp.pop %v864
    %v866 = vmul.f32 1.0, %v865
    %v867 = vtanh.pop %v853
    %v868 = vxor.u32 %v854, 2147483648
    %v869 = vmul.f32 %v868, 1.442695
    %v870 = vpow.pop %v869
    %v871 = vadd.f32 %v870, 1.0
    %v872 = vrcp.pop %v871
    %v873 = vmul.f32 1.0, %v872
    %v874 = vmul.f32 %v866, 0.0
    %v875 = vmul.f32 %v860, %v867
    %v876 = vadd.f32 %v874, %v875
    %v877 = vtanh.pop %v876
    %v878 = vmul.f32 %v873, %v877
    %v880 = vlaneseq
    %v881 = vshrl.u32 %v880, 7
    %v882 = vsub.s32 0, %v881
    %v883 = vrot.slane %v604, %v882
    %v885 = vmul.f32 %v878, %v883
    %886 = vadd.xlane.f32.xlu0 %v885
    %v887 = vpop.xlane.xlu0 %886
    %v888 = vld [vmem:[#allocation2 + $0x20] sm:$0xff]
    %v889 = vld [vmem:[#allocation2 + $0x28] sm:$0xff]
    %v890 = vld [vmem:[#allocation2 + $0x30] sm:$0xff]
    %v891 = vld [vmem:[#allocation2 + $0x38] sm:$0xff]
    %v892 = vpack.c.bf16 %v878, %v878
    %893 = vmatprep.subr.bf16.mxu0 %v734
    %894 = vmatpush1.bf16.msra.mxu0 %v733
    %895 = vmatprep.subr.bf16.mxu0 %v730
    %896 = vmatpush1.bf16.msra.mxu0 %v729
    %897 = vmatprep.subr.bf16.mxu0 %v726
    %898 = vmatpush1.bf16.msra.mxu0 %v725
    %899 = vmatprep.subr.bf16.mxu0 %v722
    %900 = vmatpush1.bf16.msra.mxu0 %v721
    %901 = vmatprep.subr.bf16.mxu0 %v718
    %902 = vmatpush1.bf16.msra.mxu0 %v717
    %903 = vmatprep.subr.bf16.mxu0 %v714
    %904 = vmatpush1.bf16.msra.mxu0 %v713
    %905 = vmatprep.subr.bf16.mxu0 %v710
    %906 = vmatpush1.bf16.msra.mxu0 %v709
    %907 = vmatprep.subr.bf16.mxu0 %v706
    %908 = vmatpush1.bf16.msra.mxu0 %v705
    %909 = vmatprep.subr.bf16.mxu0 0
    %910 = vmatpush2.bf16.msra.mxu0 0
    %911 = vmatprep.subr.bf16.mxu0 0
    %912 = vmatpush2.bf16.msra.mxu0 0
    %913 = vmatprep.subr.bf16.mxu0 0
    %914 = vmatpush2.bf16.msra.mxu0 0
    %915 = vmatprep.subr.bf16.mxu0 0
    %916 = vmatpush2.bf16.msra.mxu0 0
    %917 = vmatprep.subr.bf16.mxu0 0
    %918 = vmatpush2.bf16.msra.mxu0 0
    %919 = vmatprep.subr.bf16.mxu0 0
    %920 = vmatpush2.bf16.msra.mxu0 0
    %921 = vmatprep.subr.bf16.mxu0 0
    %922 = vmatpush2.bf16.msra.mxu0 0
    %923 = vmatprep.subr.bf16.mxu0 0
    %924 = vmatpush2.bf16.msra.mxu0 0
    %925 = vmatprep.mubr.bf16.mxu0 0
    %926 = vmatmul.mubr.bf16.gmra.mxu0 %v892
    %v927 = vpop.f32.mrf.mxu0
    %v928 = vadd.f32 0.0, %v927
    %v929 = vpop.f32.mrf.mxu0
    %v930 = vadd.f32 0.0, %v929
    %v931 = vpop.f32.mrf.mxu0
    %v932 = vpop.f32.mrf.mxu0
    %933 = vdwg.mxu0
    %934 = vmatprep.subr.bf16.mxu0 %v736
    %935 = vmatpush1.bf16.msra.mxu0 %v735
    %936 = vmatprep.subr.bf16.mxu0 %v732
    %937 = vmatpush1.bf16.msra.mxu0 %v731
    %938 = vmatprep.subr.bf16.mxu0 %v728
    %939 = vmatpush1.bf16.msra.mxu0 %v727
    %940 = vmatprep.subr.bf16.mxu0 %v724
    %941 = vmatpush1.bf16.msra.mxu0 %v723
    %942 = vmatprep.subr.bf16.mxu0 %v720
    %943 = vmatpush1.bf16.msra.mxu0 %v719
    %944 = vmatprep.subr.bf16.mxu0 %v716
    %945 = vmatpush1.bf16.msra.mxu0 %v715
    %946 = vmatprep.subr.bf16.mxu0 %v712
    %947 = vmatpush1.bf16.msra.mxu0 %v711
    %948 = vmatprep.subr.bf16.mxu0 %v708
    %949 = vmatpush1.bf16.msra.mxu0 %v707
    %950 = vmatprep.subr.bf16.mxu0 0
    %951 = vmatpush2.bf16.msra.mxu0 0
    %952 = vmatprep.subr.bf16.mxu0 0
    %953 = vmatpush2.bf16.msra.mxu0 0
    %954 = vmatprep.subr.bf16.mxu0 0
    %955 = vmatpush2.bf16.msra.mxu0 0
    %956 = vmatprep.subr.bf16.mxu0 0
    %957 = vmatpush2.bf16.msra.mxu0 0
    %958 = vmatprep.subr.bf16.mxu0 0
    %959 = vmatpush2.bf16.msra.mxu0 0
    %960 = vmatprep.subr.bf16.mxu0 0
    %961 = vmatpush2.bf16.msra.mxu0 0
    %962 = vmatprep.subr.bf16.mxu0 0
    %963 = vmatpush2.bf16.msra.mxu0 0
    %964 = vmatprep.subr.bf16.mxu0 0
    %965 = vmatpush2.bf16.msra.mxu0 0
    %966 = vmatprep.mubr.bf16.mxu0 0
    %967 = vmatmul.mubr.bf16.gmra.mxu0 %v892
    %v968 = vpop.f32.mrf.mxu0
    %v969 = vadd.f32 0.0, %v968
    %v970 = vpop.f32.mrf.mxu0
    %v971 = vadd.f32 0.0, %v970
    %v972 = vpop.f32.mrf.mxu0
    %v973 = vpop.f32.mrf.mxu0
    %974 = vdwg.mxu0
    %v975 = vadd.f32 %v888, %v928
    %v976 = vadd.f32 %v889, %v930
    %v977 = vadd.f32 %v890, %v969
    %v978 = vadd.f32 %v891, %v971
    %v979 = vxor.u32 %v975, 2147483648
    %v980 = vmul.f32 %v979, 1.442695
    %v981 = vpow.pop %v980
    %v982 = vadd.f32 %v981, 1.0
    %v983 = vrcp.pop %v982
    %v984 = vmul.f32 1.0, %v983
    %v985 = vxor.u32 %v976, 2147483648
    %v986 = vmul.f32 %v985, 1.442695
    %v987 = vpow.pop %v986
    %v988 = vadd.f32 %v987, 1.0
    %v989 = vrcp.pop %v988
    %v990 = vmul.f32 1.0, %v989
    %v991 = vtanh.pop %v977
    %v992 = vxor.u32 %v978, 2147483648
    %v993 = vmul.f32 %v992, 1.442695
    %v994 = vpow.pop %v993
    %v995 = vadd.f32 %v994, 1.0
    %v996 = vrcp.pop %v995
    %v997 = vmul.f32 1.0, %v996
    %v998 = vmul.f32 %v990, %v876
    %v999 = vmul.f32 %v984, %v991
    %v1000 = vadd.f32 %v998, %v999
    %v1001 = vtanh.pop %v1000
    %v1002 = vmul.f32 %v997, %v1001
    %v1003 = vmul.f32 %v1002, %v883
    %1004 = vadd.xlane.f32.xlu0 %v1003
    %v1005 = vpop.xlane.xlu0 %1004
    %v1006 = vld [vmem:[#allocation2 + $0x40] sm:$0xff]
    %v1007 = vld [vmem:[#allocation2 + $0x48] sm:$0xff]
    %v1008 = vld [vmem:[#allocation2 + $0x50] sm:$0xff]
    %v1009 = vld [vmem:[#allocation2 + $0x58] sm:$0xff]
    %v1010 = vpack.c.bf16 %v1002, %v1002
    %1011 = vmatprep.subr.bf16.mxu0 %v734
    %1012 = vmatpush1.bf16.msra.mxu0 %v733
    %1013 = vmatprep.subr.bf16.mxu0 %v730
    %1014 = vmatpush1.bf16.msra.mxu0 %v729
    %1015 = vmatprep.subr.bf16.mxu0 %v726
    %1016 = vmatpush1.bf16.msra.mxu0 %v725
    %1017 = vmatprep.subr.bf16.mxu0 %v722
    %1018 = vmatpush1.bf16.msra.mxu0 %v721
    %1019 = vmatprep.subr.bf16.mxu0 %v718
    %1020 = vmatpush1.bf16.msra.mxu0 %v717
    %1021 = vmatprep.subr.bf16.mxu0 %v714
    %1022 = vmatpush1.bf16.msra.mxu0 %v713
    %1023 = vmatprep.subr.bf16.mxu0 %v710
    %1024 = vmatpush1.bf16.msra.mxu0 %v709
    %1025 = vmatprep.subr.bf16.mxu0 %v706
    %1026 = vmatpush1.bf16.msra.mxu0 %v705
    %1027 = vmatprep.subr.bf16.mxu0 0
    %1028 = vmatpush2.bf16.msra.mxu0 0
    %1029 = vmatprep.subr.bf16.mxu0 0
    %1030 = vmatpush2.bf16.msra.mxu0 0
    %1031 = vmatprep.subr.bf16.mxu0 0
    %1032 = vmatpush2.bf16.msra.mxu0 0
    %1033 = vmatprep.subr.bf16.mxu0 0
    %1034 = vmatpush2.bf16.msra.mxu0 0
    %1035 = vmatprep.subr.bf16.mxu0 0
    %1036 = vmatpush2.bf16.msra.mxu0 0
    %1037 = vmatprep.subr.bf16.mxu0 0
    %1038 = vmatpush2.bf16.msra.mxu0 0
    %1039 = vmatprep.subr.bf16.mxu0 0
    %1040 = vmatpush2.bf16.msra.mxu0 0
    %1041 = vmatprep.subr.bf16.mxu0 0
    %1042 = vmatpush2.bf16.msra.mxu0 0
    %1043 = vmatprep.mubr.bf16.mxu0 0
    %1044 = vmatmul.mubr.bf16.gmra.mxu0 %v1010
    %v1045 = vpop.f32.mrf.mxu0
    %v1046 = vadd.f32 0.0, %v1045
    %v1047 = vpop.f32.mrf.mxu0
    %v1048 = vadd.f32 0.0, %v1047
    %v1049 = vpop.f32.mrf.mxu0
    %v1050 = vpop.f32.mrf.mxu0
    %1051 = vdwg.mxu0
    %1052 = vmatprep.subr.bf16.mxu0 %v736
    %1053 = vmatpush1.bf16.msra.mxu0 %v735
    %1054 = vmatprep.subr.bf16.mxu0 %v732
    %1055 = vmatpush1.bf16.msra.mxu0 %v731
    %1056 = vmatprep.subr.bf16.mxu0 %v728
    %1057 = vmatpush1.bf16.msra.mxu0 %v727
    %1058 = vmatprep.subr.bf16.mxu0 %v724
    %1059 = vmatpush1.bf16.msra.mxu0 %v723
    %1060 = vmatprep.subr.bf16.mxu0 %v720
    %1061 = vmatpush1.bf16.msra.mxu0 %v719
    %1062 = vmatprep.subr.bf16.mxu0 %v716
    %1063 = vmatpush1.bf16.msra.mxu0 %v715
    %1064 = vmatprep.subr.bf16.mxu0 %v712
    %1065 = vmatpush1.bf16.msra.mxu0 %v711
    %1066 = vmatprep.subr.bf16.mxu0 %v708
    %1067 = vmatpush1.bf16.msra.mxu0 %v707
    %1068 = vmatprep.subr.bf16.mxu0 0
    %1069 = vmatpush2.bf16.msra.mxu0 0
    %1070 = vmatprep.subr.bf16.mxu0 0
    %1071 = vmatpush2.bf16.msra.mxu0 0
    %1072 = vmatprep.subr.bf16.mxu0 0
    %1073 = vmatpush2.bf16.msra.mxu0 0
    %1074 = vmatprep.subr.bf16.mxu0 0
    %1075 = vmatpush2.bf16.msra.mxu0 0
    %1076 = vmatprep.subr.bf16.mxu0 0
    %1077 = vmatpush2.bf16.msra.mxu0 0
    %1078 = vmatprep.subr.bf16.mxu0 0
    %1079 = vmatpush2.bf16.msra.mxu0 0
    %1080 = vmatprep.subr.bf16.mxu0 0
    %1081 = vmatpush2.bf16.msra.mxu0 0
    %1082 = vmatprep.subr.bf16.mxu0 0
    %1083 = vmatpush2.bf16.msra.mxu0 0
    %1084 = vmatprep.mubr.bf16.mxu0 0
    %1085 = vmatmul.mubr.bf16.gmra.mxu0 %v1010
    %v1086 = vpop.f32.mrf.mxu0
    %v1087 = vadd.f32 0.0, %v1086
    %v1088 = vpop.f32.mrf.mxu0
    %v1089 = vadd.f32 0.0, %v1088
    %v1090 = vpop.f32.mrf.mxu0
    %v1091 = vpop.f32.mrf.mxu0
    %1092 = vdwg.mxu0
    %v1093 = vadd.f32 %v1006, %v1046
    %v1094 = vadd.f32 %v1007, %v1048
    %v1095 = vadd.f32 %v1008, %v1087
    %v1096 = vadd.f32 %v1009, %v1089
    %v1097 = vxor.u32 %v1093, 2147483648
    %v1098 = vmul.f32 %v1097, 1.442695
    %v1099 = vpow.pop %v1098
    %v1100 = vadd.f32 %v1099, 1.0
    %v1101 = vrcp.pop %v1100
    %v1102 = vmul.f32 1.0, %v1101
    %v1103 = vxor.u32 %v1094, 2147483648
    %v1104 = vmul.f32 %v1103, 1.442695
    %v1105 = vpow.pop %v1104
    %v1106 = vadd.f32 %v1105, 1.0
    %v1107 = vrcp.pop %v1106
    %v1108 = vmul.f32 1.0, %v1107
    %v1109 = vtanh.pop %v1095
    %v1110 = vxor.u32 %v1096, 2147483648
    %v1111 = vmul.f32 %v1110, 1.442695
    %v1112 = vpow.pop %v1111
    %v1113 = vadd.f32 %v1112, 1.0
    %v1114 = vrcp.pop %v1113
    %v1115 = vmul.f32 1.0, %v1114
    %v1116 = vmul.f32 %v1108, %v1000
    %v1117 = vmul.f32 %v1102, %v1109
    %v1118 = vadd.f32 %v1116, %v1117
    %v1119 = vtanh.pop %v1118
    %v1120 = vmul.f32 %v1115, %v1119
    %v1121 = vmul.f32 %v1120, %v883
    %1122 = vadd.xlane.f32.xlu0 %v1121
    %v1123 = vpop.xlane.xlu0 %1122
    %v1124 = vld [vmem:[#allocation2 + $0x60] sm:$0xff]
    %v1125 = vld [vmem:[#allocation2 + $0x68] sm:$0xff]
    %v1126 = vld [vmem:[#allocation2 + $0x70] sm:$0xff]
    %v1127 = vld [vmem:[#allocation2 + $0x78] sm:$0xff]
    %v1128 = vpack.c.bf16 %v1120, %v1120
    %1129 = vmatprep.subr.bf16.mxu0 %v734
    %1130 = vmatpush1.bf16.msra.mxu0 %v733
    %1131 = vmatprep.subr.bf16.mxu0 %v730
    %1132 = vmatpush1.bf16.msra.mxu0 %v729
    %1133 = vmatprep.subr.bf16.mxu0 %v726
    %1134 = vmatpush1.bf16.msra.mxu0 %v725
    %1135 = vmatprep.subr.bf16.mxu0 %v722
    %1136 = vmatpush1.bf16.msra.mxu0 %v721
    %1137 = vmatprep.subr.bf16.mxu0 %v718
    %1138 = vmatpush1.bf16.msra.mxu0 %v717
    %1139 = vmatprep.subr.bf16.mxu0 %v714
    %1140 = vmatpush1.bf16.msra.mxu0 %v713
    %1141 = vmatprep.subr.bf16.mxu0 %v710
    %1142 = vmatpush1.bf16.msra.mxu0 %v709
    %1143 = vmatprep.subr.bf16.mxu0 %v706
    %1144 = vmatpush1.bf16.msra.mxu0 %v705
    %1145 = vmatprep.subr.bf16.mxu0 0
    %1146 = vmatpush2.bf16.msra.mxu0 0
    %1147 = vmatprep.subr.bf16.mxu0 0
    %1148 = vmatpush2.bf16.msra.mxu0 0
    %1149 = vmatprep.subr.bf16.mxu0 0
    %1150 = vmatpush2.bf16.msra.mxu0 0
    %1151 = vmatprep.subr.bf16.mxu0 0
    %1152 = vmatpush2.bf16.msra.mxu0 0
    %1153 = vmatprep.subr.bf16.mxu0 0
    %1154 = vmatpush2.bf16.msra.mxu0 0
    %1155 = vmatprep.subr.bf16.mxu0 0
    %1156 = vmatpush2.bf16.msra.mxu0 0
    %1157 = vmatprep.subr.bf16.mxu0 0
    %1158 = vmatpush2.bf16.msra.mxu0 0
    %1159 = vmatprep.subr.bf16.mxu0 0
    %1160 = vmatpush2.bf16.msra.mxu0 0
    %1161 = vmatprep.mubr.bf16.mxu0 0
    %1162 = vmatmul.mubr.bf16.gmra.mxu0 %v1128
    %v1163 = vpop.f32.mrf.mxu0
    %v1164 = vadd.f32 0.0, %v1163
    %v1165 = vpop.f32.mrf.mxu0
    %v1166 = vadd.f32 0.0, %v1165
    %v1167 = vpop.f32.mrf.mxu0
    %v1168 = vpop.f32.mrf.mxu0
    %1169 = vdwg.mxu0
    %1170 = vmatprep.subr.bf16.mxu0 %v736
    %1171 = vmatpush1.bf16.msra.mxu0 %v735
    %1172 = vmatprep.subr.bf16.mxu0 %v732
    %1173 = vmatpush1.bf16.msra.mxu0 %v731
    %1174 = vmatprep.subr.bf16.mxu0 %v728
    %1175 = vmatpush1.bf16.msra.mxu0 %v727
    %1176 = vmatprep.subr.bf16.mxu0 %v724
    %1177 = vmatpush1.bf16.msra.mxu0 %v723
    %1178 = vmatprep.subr.bf16.mxu0 %v720
    %1179 = vmatpush1.bf16.msra.mxu0 %v719
    %1180 = vmatprep.subr.bf16.mxu0 %v716
    %1181 = vmatpush1.bf16.msra.mxu0 %v715
    %1182 = vmatprep.subr.bf16.mxu0 %v712
    %1183 = vmatpush1.bf16.msra.mxu0 %v711
    %1184 = vmatprep.subr.bf16.mxu0 %v708
    %1185 = vmatpush1.bf16.msra.mxu0 %v707
    %1186 = vmatprep.subr.bf16.mxu0 0
    %1187 = vmatpush2.bf16.msra.mxu0 0
    %1188 = vmatprep.subr.bf16.mxu0 0
    %1189 = vmatpush2.bf16.msra.mxu0 0
    %1190 = vmatprep.subr.bf16.mxu0 0
    %1191 = vmatpush2.bf16.msra.mxu0 0
    %1192 = vmatprep.subr.bf16.mxu0 0
    %1193 = vmatpush2.bf16.msra.mxu0 0
    %1194 = vmatprep.subr.bf16.mxu0 0
    %1195 = vmatpush2.bf16.msra.mxu0 0
    %1196 = vmatprep.subr.bf16.mxu0 0
    %1197 = vmatpush2.bf16.msra.mxu0 0
    %1198 = vmatprep.subr.bf16.mxu0 0
    %1199 = vmatpush2.bf16.msra.mxu0 0
    %1200 = vmatprep.subr.bf16.mxu0 0
    %1201 = vmatpush2.bf16.msra.mxu0 0
    %1202 = vmatprep.mubr.bf16.mxu0 0
    %1203 = vmatmul.mubr.bf16.gmra.mxu0 %v1128
    %v1204 = vpop.f32.mrf.mxu0
    %v1205 = vadd.f32 0.0, %v1204
    %v1206 = vpop.f32.mrf.mxu0
    %v1207 = vadd.f32 0.0, %v1206
    %v1208 = vpop.f32.mrf.mxu0
    %v1209 = vpop.f32.mrf.mxu0
    %1210 = vdwg.mxu0
    %v1211 = vadd.f32 %v1124, %v1164
    %v1212 = vadd.f32 %v1125, %v1166
    %v1213 = vadd.f32 %v1126, %v1205
    %v1214 = vadd.f32 %v1127, %v1207
    %v1215 = vxor.u32 %v1211, 2147483648
    %v1216 = vmul.f32 %v1215, 1.442695
    %v1217 = vpow.pop %v1216
    %v1218 = vadd.f32 %v1217, 1.0
    %v1219 = vrcp.pop %v1218
    %v1220 = vmul.f32 1.0, %v1219
    %v1221 = vxor.u32 %v1212, 2147483648
    %v1222 = vmul.f32 %v1221, 1.442695
    %v1223 = vpow.pop %v1222
    %v1224 = vadd.f32 %v1223, 1.0
    %v1225 = vrcp.pop %v1224
    %v1226 = vmul.f32 1.0, %v1225
    %v1227 = vtanh.pop %v1213
    %v1228 = vxor.u32 %v1214, 2147483648
    %v1229 = vmul.f32 %v1228, 1.442695
    %v1230 = vpow.pop %v1229
    %v1231 = vadd.f32 %v1230, 1.0
    %v1232 = vrcp.pop %v1231
    %v1233 = vmul.f32 1.0, %v1232
    %v1234 = vmul.f32 %v1226, %v1118
    %v1235 = vmul.f32 %v1220, %v1227
    %v1236 = vadd.f32 %v1234, %v1235
    %v1237 = vtanh.pop %v1236
    %v1238 = vmul.f32 %v1233, %v1237
    %v1239 = vmul.f32 %v1238, %v883
    %1240 = vadd.xlane.f32.xlu0 %v1239
    %v1241 = vpop.xlane.xlu0 %1240
    %v1242 = vld [vmem:[#allocation2 + $0x80] sm:$0xff]
    %v1243 = vld [vmem:[#allocation2 + $0x88] sm:$0xff]
    %v1244 = vld [vmem:[#allocation2 + $0x90] sm:$0xff]
    %v1245 = vld [vmem:[#allocation2 + $0x98] sm:$0xff]
    %v1246 = vpack.c.bf16 %v1238, %v1238
    %1247 = vmatprep.subr.bf16.mxu0 %v734
    %1248 = vmatpush1.bf16.msra.mxu0 %v733
    %1249 = vmatprep.subr.bf16.mxu0 %v730
    %1250 = vmatpush1.bf16.msra.mxu0 %v729
    %1251 = vmatprep.subr.bf16.mxu0 %v726
    %1252 = vmatpush1.bf16.msra.mxu0 %v725
    %1253 = vmatprep.subr.bf16.mxu0 %v722
    %1254 = vmatpush1.bf16.msra.mxu0 %v721
    %1255 = vmatprep.subr.bf16.mxu0 %v718
    %1256 = vmatpush1.bf16.msra.mxu0 %v717
    %1257 = vmatprep.subr.bf16.mxu0 %v714
    %1258 = vmatpush1.bf16.msra.mxu0 %v713
    %1259 = vmatprep.subr.bf16.mxu0 %v710
    %1260 = vmatpush1.bf16.msra.mxu0 %v709
    %1261 = vmatprep.subr.bf16.mxu0 %v706
    %1262 = vmatpush1.bf16.msra.mxu0 %v705
    %1263 = vmatprep.subr.bf16.mxu0 0
    %1264 = vmatpush2.bf16.msra.mxu0 0
    %1265 = vmatprep.subr.bf16.mxu0 0
    %1266 = vmatpush2.bf16.msra.mxu0 0
    %1267 = vmatprep.subr.bf16.mxu0 0
    %1268 = vmatpush2.bf16.msra.mxu0 0
    %1269 = vmatprep.subr.bf16.mxu0 0
    %1270 = vmatpush2.bf16.msra.mxu0 0
    %1271 = vmatprep.subr.bf16.mxu0 0
    %1272 = vmatpush2.bf16.msra.mxu0 0
    %1273 = vmatprep.subr.bf16.mxu0 0
    %1274 = vmatpush2.bf16.msra.mxu0 0
    %1275 = vmatprep.subr.bf16.mxu0 0
    %1276 = vmatpush2.bf16.msra.mxu0 0
    %1277 = vmatprep.subr.bf16.mxu0 0
    %1278 = vmatpush2.bf16.msra.mxu0 0
    %1279 = vmatprep.mubr.bf16.mxu0 0
    %1280 = vmatmul.mubr.bf16.gmra.mxu0 %v1246
    %v1281 = vpop.f32.mrf.mxu0
    %v1282 = vadd.f32 0.0, %v1281
    %v1283 = vpop.f32.mrf.mxu0
    %v1284 = vadd.f32 0.0, %v1283
    %v1285 = vpop.f32.mrf.mxu0
    %v1286 = vpop.f32.mrf.mxu0
    %1287 = vdwg.mxu0
    %1288 = vmatprep.subr.bf16.mxu0 %v736
    %1289 = vmatpush1.bf16.msra.mxu0 %v735
    %1290 = vmatprep.subr.bf16.mxu0 %v732
    %1291 = vmatpush1.bf16.msra.mxu0 %v731
    %1292 = vmatprep.subr.bf16.mxu0 %v728
    %1293 = vmatpush1.bf16.msra.mxu0 %v727
    %1294 = vmatprep.subr.bf16.mxu0 %v724
    %1295 = vmatpush1.bf16.msra.mxu0 %v723
    %1296 = vmatprep.subr.bf16.mxu0 %v720
    %1297 = vmatpush1.bf16.msra.mxu0 %v719
    %1298 = vmatprep.subr.bf16.mxu0 %v716
    %1299 = vmatpush1.bf16.msra.mxu0 %v715
    %1300 = vmatprep.subr.bf16.mxu0 %v712
    %1301 = vmatpush1.bf16.msra.mxu0 %v711
    %1302 = vmatprep.subr.bf16.mxu0 %v708
    %1303 = vmatpush1.bf16.msra.mxu0 %v707
    %1304 = vmatprep.subr.bf16.mxu0 0
    %1305 = vmatpush2.bf16.msra.mxu0 0
    %1306 = vmatprep.subr.bf16.mxu0 0
    %1307 = vmatpush2.bf16.msra.mxu0 0
    %1308 = vmatprep.subr.bf16.mxu0 0
    %1309 = vmatpush2.bf16.msra.mxu0 0
    %1310 = vmatprep.subr.bf16.mxu0 0
    %1311 = vmatpush2.bf16.msra.mxu0 0
    %1312 = vmatprep.subr.bf16.mxu0 0
    %1313 = vmatpush2.bf16.msra.mxu0 0
    %1314 = vmatprep.subr.bf16.mxu0 0
    %1315 = vmatpush2.bf16.msra.mxu0 0
    %1316 = vmatprep.subr.bf16.mxu0 0
    %1317 = vmatpush2.bf16.msra.mxu0 0
    %1318 = vmatprep.subr.bf16.mxu0 0
    %1319 = vmatpush2.bf16.msra.mxu0 0
    %1320 = vmatprep.mubr.bf16.mxu0 0
    %1321 = vmatmul.mubr.bf16.gmra.mxu0 %v1246
    %v1322 = vpop.f32.mrf.mxu0
    %v1323 = vadd.f32 0.0, %v1322
    %v1324 = vpop.f32.mrf.mxu0
    %v1325 = vadd.f32 0.0, %v1324
    %v1326 = vpop.f32.mrf.mxu0
    %v1327 = vpop.f32.mrf.mxu0
    %1328 = vdwg.mxu0
    %v1329 = vadd.f32 %v1242, %v1282
    %v1330 = vadd.f32 %v1243, %v1284
    %v1331 = vadd.f32 %v1244, %v1323
    %v1332 = vadd.f32 %v1245, %v1325
    %v1333 = vxor.u32 %v1329, 2147483648
    %v1334 = vmul.f32 %v1333, 1.442695
    %v1335 = vpow.pop %v1334
    %v1336 = vadd.f32 %v1335, 1.0
    %v1337 = vrcp.pop %v1336
    %v1338 = vmul.f32 1.0, %v1337
    %v1339 = vxor.u32 %v1330, 2147483648
    %v1340 = vmul.f32 %v1339, 1.442695
    %v1341 = vpow.pop %v1340
    %v1342 = vadd.f32 %v1341, 1.0
    %v1343 = vrcp.pop %v1342
    %v1344 = vmul.f32 1.0, %v1343
    %v1345 = vtanh.pop %v1331
    %v1346 = vxor.u32 %v1332, 2147483648
    %v1347 = vmul.f32 %v1346, 1.442695
    %v1348 = vpow.pop %v1347
    %v1349 = vadd.f32 %v1348, 1.0
    %v1350 = vrcp.pop %v1349
    %v1351 = vmul.f32 1.0, %v1350
    %v1352 = vmul.f32 %v1344, %v1236
    %v1353 = vmul.f32 %v1338, %v1345
    %v1354 = vadd.f32 %v1352, %v1353
    %v1355 = vtanh.pop %v1354
    %v1356 = vmul.f32 %v1351, %v1355
    %v1357 = vmul.f32 %v1356, %v883
    %1358 = vadd.xlane.f32.xlu0 %v1357
    %v1359 = vpop.xlane.xlu0 %1358
    %v1360 = vld [vmem:[#allocation2 + $0xa0] sm:$0xff]
    %v1361 = vld [vmem:[#allocation2 + $0xa8] sm:$0xff]
    %v1362 = vld [vmem:[#allocation2 + $0xb0] sm:$0xff]
    %v1363 = vld [vmem:[#allocation2 + $0xb8] sm:$0xff]
    %v1364 = vpack.c.bf16 %v1356, %v1356
    %1365 = vmatprep.subr.bf16.mxu0 %v734
    %1366 = vmatpush1.bf16.msra.mxu0 %v733
    %1367 = vmatprep.subr.bf16.mxu0 %v730
    %1368 = vmatpush1.bf16.msra.mxu0 %v729
    %1369 = vmatprep.subr.bf16.mxu0 %v726
    %1370 = vmatpush1.bf16.msra.mxu0 %v725
    %1371 = vmatprep.subr.bf16.mxu0 %v722
    %1372 = vmatpush1.bf16.msra.mxu0 %v721
    %1373 = vmatprep.subr.bf16.mxu0 %v718
    %1374 = vmatpush1.bf16.msra.mxu0 %v717
    %1375 = vmatprep.subr.bf16.mxu0 %v714
    %1376 = vmatpush1.bf16.msra.mxu0 %v713
    %1377 = vmatprep.subr.bf16.mxu0 %v710
    %1378 = vmatpush1.bf16.msra.mxu0 %v709
    %1379 = vmatprep.subr.bf16.mxu0 %v706
    %1380 = vmatpush1.bf16.msra.mxu0 %v705
    %1381 = vmatprep.subr.bf16.mxu0 0
    %1382 = vmatpush2.bf16.msra.mxu0 0
    %1383 = vmatprep.subr.bf16.mxu0 0
    %1384 = vmatpush2.bf16.msra.mxu0 0
    %1385 = vmatprep.subr.bf16.mxu0 0
    %1386 = vmatpush2.bf16.msra.mxu0 0
    %1387 = vmatprep.subr.bf16.mxu0 0
    %1388 = vmatpush2.bf16.msra.mxu0 0
    %1389 = vmatprep.subr.bf16.mxu0 0
    %1390 = vmatpush2.bf16.msra.mxu0 0
    %1391 = vmatprep.subr.bf16.mxu0 0
    %1392 = vmatpush2.bf16.msra.mxu0 0
    %1393 = vmatprep.subr.bf16.mxu0 0
    %1394 = vmatpush2.bf16.msra.mxu0 0
    %1395 = vmatprep.subr.bf16.mxu0 0
    %1396 = vmatpush2.bf16.msra.mxu0 0
    %1397 = vmatprep.mubr.bf16.mxu0 0
    %1398 = vmatmul.mubr.bf16.gmra.mxu0 %v1364
    %v1399 = vpop.f32.mrf.mxu0
    %v1400 = vadd.f32 0.0, %v1399
    %v1401 = vpop.f32.mrf.mxu0
    %v1402 = vadd.f32 0.0, %v1401
    %v1403 = vpop.f32.mrf.mxu0
    %v1404 = vpop.f32.mrf.mxu0
    %1405 = vdwg.mxu0
    %1406 = vmatprep.subr.bf16.mxu0 %v736
    %1407 = vmatpush1.bf16.msra.mxu0 %v735
    %1408 = vmatprep.subr.bf16.mxu0 %v732
    %1409 = vmatpush1.bf16.msra.mxu0 %v731
    %1410 = vmatprep.subr.bf16.mxu0 %v728
    %1411 = vmatpush1.bf16.msra.mxu0 %v727
    %1412 = vmatprep.subr.bf16.mxu0 %v724
    %1413 = vmatpush1.bf16.msra.mxu0 %v723
    %1414 = vmatprep.subr.bf16.mxu0 %v720
    %1415 = vmatpush1.bf16.msra.mxu0 %v719
    %1416 = vmatprep.subr.bf16.mxu0 %v716
    %1417 = vmatpush1.bf16.msra.mxu0 %v715
    %1418 = vmatprep.subr.bf16.mxu0 %v712
    %1419 = vmatpush1.bf16.msra.mxu0 %v711
    %1420 = vmatprep.subr.bf16.mxu0 %v708
    %1421 = vmatpush1.bf16.msra.mxu0 %v707
    %1422 = vmatprep.subr.bf16.mxu0 0
    %1423 = vmatpush2.bf16.msra.mxu0 0
    %1424 = vmatprep.subr.bf16.mxu0 0
    %1425 = vmatpush2.bf16.msra.mxu0 0
    %1426 = vmatprep.subr.bf16.mxu0 0
    %1427 = vmatpush2.bf16.msra.mxu0 0
    %1428 = vmatprep.subr.bf16.mxu0 0
    %1429 = vmatpush2.bf16.msra.mxu0 0
    %1430 = vmatprep.subr.bf16.mxu0 0
    %1431 = vmatpush2.bf16.msra.mxu0 0
    %1432 = vmatprep.subr.bf16.mxu0 0
    %1433 = vmatpush2.bf16.msra.mxu0 0
    %1434 = vmatprep.subr.bf16.mxu0 0
    %1435 = vmatpush2.bf16.msra.mxu0 0
    %1436 = vmatprep.subr.bf16.mxu0 0
    %1437 = vmatpush2.bf16.msra.mxu0 0
    %1438 = vmatprep.mubr.bf16.mxu0 0
    %1439 = vmatmul.mubr.bf16.gmra.mxu0 %v1364
    %v1440 = vpop.f32.mrf.mxu0
    %v1441 = vadd.f32 0.0, %v1440
    %v1442 = vpop.f32.mrf.mxu0
    %v1443 = vadd.f32 0.0, %v1442
    %v1444 = vpop.f32.mrf.mxu0
    %v1445 = vpop.f32.mrf.mxu0
    %1446 = vdwg.mxu0
    %v1447 = vadd.f32 %v1360, %v1400
    %v1448 = vadd.f32 %v1361, %v1402
    %v1449 = vadd.f32 %v1362, %v1441
    %v1450 = vadd.f32 %v1363, %v1443
    %v1451 = vxor.u32 %v1447, 2147483648
    %v1452 = vmul.f32 %v1451, 1.442695
    %v1453 = vpow.pop %v1452
    %v1454 = vadd.f32 %v1453, 1.0
    %v1455 = vrcp.pop %v1454
    %v1456 = vmul.f32 1.0, %v1455
    %v1457 = vxor.u32 %v1448, 2147483648
    %v1458 = vmul.f32 %v1457, 1.442695
    %v1459 = vpow.pop %v1458
    %v1460 = vadd.f32 %v1459, 1.0
    %v1461 = vrcp.pop %v1460
    %v1462 = vmul.f32 1.0, %v1461
    %v1463 = vtanh.pop %v1449
    %v1464 = vxor.u32 %v1450, 2147483648
    %v1465 = vmul.f32 %v1464, 1.442695
    %v1466 = vpow.pop %v1465
    %v1467 = vadd.f32 %v1466, 1.0
    %v1468 = vrcp.pop %v1467
    %v1469 = vmul.f32 1.0, %v1468
    %v1470 = vmul.f32 %v1462, %v1354
    %v1471 = vmul.f32 %v1456, %v1463
    %v1472 = vadd.f32 %v1470, %v1471
    %v1473 = vtanh.pop %v1472
    %v1474 = vmul.f32 %v1469, %v1473
    %v1475 = vmul.f32 %v1474, %v883
    %1476 = vadd.xlane.f32.xlu0 %v1475
    %v1477 = vpop.xlane.xlu0 %1476
    %v1478 = vld [vmem:[#allocation2 + $0xc0] sm:$0xff]
    %v1479 = vld [vmem:[#allocation2 + $0xc8] sm:$0xff]
    %v1480 = vld [vmem:[#allocation2 + $0xd0] sm:$0xff]
    %v1481 = vld [vmem:[#allocation2 + $0xd8] sm:$0xff]
    %v1482 = vpack.c.bf16 %v1474, %v1474
    %1483 = vmatprep.subr.bf16.mxu0 %v734
    %1484 = vmatpush1.bf16.msra.mxu0 %v733
    %1485 = vmatprep.subr.bf16.mxu0 %v730
    %1486 = vmatpush1.bf16.msra.mxu0 %v729
    %1487 = vmatprep.subr.bf16.mxu0 %v726
    %1488 = vmatpush1.bf16.msra.mxu0 %v725
    %1489 = vmatprep.subr.bf16.mxu0 %v722
    %1490 = vmatpush1.bf16.msra.mxu0 %v721
    %1491 = vmatprep.subr.bf16.mxu0 %v718
    %1492 = vmatpush1.bf16.msra.mxu0 %v717
    %1493 = vmatprep.subr.bf16.mxu0 %v714
    %1494 = vmatpush1.bf16.msra.mxu0 %v713
    %1495 = vmatprep.subr.bf16.mxu0 %v710
    %1496 = vmatpush1.bf16.msra.mxu0 %v709
    %1497 = vmatprep.subr.bf16.mxu0 %v706
    %1498 = vmatpush1.bf16.msra.mxu0 %v705
    %1499 = vmatprep.subr.bf16.mxu0 0
    %1500 = vmatpush2.bf16.msra.mxu0 0
    %1501 = vmatprep.subr.bf16.mxu0 0
    %1502 = vmatpush2.bf16.msra.mxu0 0
    %1503 = vmatprep.subr.bf16.mxu0 0
    %1504 = vmatpush2.bf16.msra.mxu0 0
    %1505 = vmatprep.subr.bf16.mxu0 0
    %1506 = vmatpush2.bf16.msra.mxu0 0
    %1507 = vmatprep.subr.bf16.mxu0 0
    %1508 = vmatpush2.bf16.msra.mxu0 0
    %1509 = vmatprep.subr.bf16.mxu0 0
    %1510 = vmatpush2.bf16.msra.mxu0 0
    %1511 = vmatprep.subr.bf16.mxu0 0
    %1512 = vmatpush2.bf16.msra.mxu0 0
    %1513 = vmatprep.subr.bf16.mxu0 0
    %1514 = vmatpush2.bf16.msra.mxu0 0
    %1515 = vmatprep.mubr.bf16.mxu0 0
    %1516 = vmatmul.mubr.bf16.gmra.mxu0 %v1482
    %v1517 = vpop.f32.mrf.mxu0
    %v1518 = vadd.f32 0.0, %v1517
    %v1519 = vpop.f32.mrf.mxu0
    %v1520 = vadd.f32 0.0, %v1519
    %v1521 = vpop.f32.mrf.mxu0
    %v1522 = vpop.f32.mrf.mxu0
    %1523 = vdwg.mxu0
    %1524 = vmatprep.subr.bf16.mxu0 %v736
    %1525 = vmatpush1.bf16.msra.mxu0 %v735
    %1526 = vmatprep.subr.bf16.mxu0 %v732
    %1527 = vmatpush1.bf16.msra.mxu0 %v731
    %1528 = vmatprep.subr.bf16.mxu0 %v728
    %1529 = vmatpush1.bf16.msra.mxu0 %v727
    %1530 = vmatprep.subr.bf16.mxu0 %v724
    %1531 = vmatpush1.bf16.msra.mxu0 %v723
    %1532 = vmatprep.subr.bf16.mxu0 %v720
    %1533 = vmatpush1.bf16.msra.mxu0 %v719
    %1534 = vmatprep.subr.bf16.mxu0 %v716
    %1535 = vmatpush1.bf16.msra.mxu0 %v715
    %1536 = vmatprep.subr.bf16.mxu0 %v712
    %1537 = vmatpush1.bf16.msra.mxu0 %v711
    %1538 = vmatprep.subr.bf16.mxu0 %v708
    %1539 = vmatpush1.bf16.msra.mxu0 %v707
    %1540 = vmatprep.subr.bf16.mxu0 0
    %1541 = vmatpush2.bf16.msra.mxu0 0
    %1542 = vmatprep.subr.bf16.mxu0 0
    %1543 = vmatpush2.bf16.msra.mxu0 0
    %1544 = vmatprep.subr.bf16.mxu0 0
    %1545 = vmatpush2.bf16.msra.mxu0 0
    %1546 = vmatprep.subr.bf16.mxu0 0
    %1547 = vmatpush2.bf16.msra.mxu0 0
    %1548 = vmatprep.subr.bf16.mxu0 0
    %1549 = vmatpush2.bf16.msra.mxu0 0
    %1550 = vmatprep.subr.bf16.mxu0 0
    %1551 = vmatpush2.bf16.msra.mxu0 0
    %1552 = vmatprep.subr.bf16.mxu0 0
    %1553 = vmatpush2.bf16.msra.mxu0 0
    %1554 = vmatprep.subr.bf16.mxu0 0
    %1555 = vmatpush2.bf16.msra.mxu0 0
    %1556 = vmatprep.mubr.bf16.mxu0 0
    %1557 = vmatmul.mubr.bf16.gmra.mxu0 %v1482
    %v1558 = vpop.f32.mrf.mxu0
    %v1559 = vadd.f32 0.0, %v1558
    %v1560 = vpop.f32.mrf.mxu0
    %v1561 = vadd.f32 0.0, %v1560
    %v1562 = vpop.f32.mrf.mxu0
    %v1563 = vpop.f32.mrf.mxu0
    %1564 = vdwg.mxu0
    %v1565 = vadd.f32 %v1478, %v1518
    %v1566 = vadd.f32 %v1479, %v1520
    %v1567 = vadd.f32 %v1480, %v1559
    %v1568 = vadd.f32 %v1481, %v1561
    %v1569 = vxor.u32 %v1565, 2147483648
    %v1570 = vmul.f32 %v1569, 1.442695
    %v1571 = vpow.pop %v1570
    %v1572 = vadd.f32 %v1571, 1.0
    %v1573 = vrcp.pop %v1572
    %v1574 = vmul.f32 1.0, %v1573
    %v1575 = vxor.u32 %v1566, 2147483648
    %v1576 = vmul.f32 %v1575, 1.442695
    %v1577 = vpow.pop %v1576
    %v1578 = vadd.f32 %v1577, 1.0
    %v1579 = vrcp.pop %v1578
    %v1580 = vmul.f32 1.0, %v1579
    %v1581 = vtanh.pop %v1567
    %v1582 = vxor.u32 %v1568, 2147483648
    %v1583 = vmul.f32 %v1582, 1.442695
    %v1584 = vpow.pop %v1583
    %v1585 = vadd.f32 %v1584, 1.0
    %v1586 = vrcp.pop %v1585
    %v1587 = vmul.f32 1.0, %v1586
    %v1588 = vmul.f32 %v1580, %v1472
    %v1589 = vmul.f32 %v1574, %v1581
    %v1590 = vadd.f32 %v1588, %v1589
    %v1591 = vtanh.pop %v1590
    %v1592 = vmul.f32 %v1587, %v1591
    %v1593 = vmul.f32 %v1592, %v883
    %1594 = vadd.xlane.f32.xlu0 %v1593
    %v1595 = vpop.xlane.xlu0 %1594
    %v1596 = vld [vmem:[#allocation2 + $0xe0] sm:$0xff]
    %v1597 = vld [vmem:[#allocation2 + $0xe8] sm:$0xff]
    %v1598 = vld [vmem:[#allocation2 + $0xf0] sm:$0xff]
    %v1599 = vld [vmem:[#allocation2 + $0xf8] sm:$0xff]
    %v1600 = vpack.c.bf16 %v1592, %v1592
    %1601 = vmatprep.subr.bf16.mxu0 %v734
    %1602 = vmatpush1.bf16.msra.mxu0 %v733
    %1603 = vmatprep.subr.bf16.mxu0 %v730
    %1604 = vmatpush1.bf16.msra.mxu0 %v729
    %1605 = vmatprep.subr.bf16.mxu0 %v726
    %1606 = vmatpush1.bf16.msra.mxu0 %v725
    %1607 = vmatprep.subr.bf16.mxu0 %v722
    %1608 = vmatpush1.bf16.msra.mxu0 %v721
    %1609 = vmatprep.subr.bf16.mxu0 %v718
    %1610 = vmatpush1.bf16.msra.mxu0 %v717
    %1611 = vmatprep.subr.bf16.mxu0 %v714
    %1612 = vmatpush1.bf16.msra.mxu0 %v713
    %1613 = vmatprep.subr.bf16.mxu0 %v710
    %1614 = vmatpush1.bf16.msra.mxu0 %v709
    %1615 = vmatprep.subr.bf16.mxu0 %v706
    %1616 = vmatpush1.bf16.msra.mxu0 %v705
    %1617 = vmatprep.subr.bf16.mxu0 0
    %1618 = vmatpush2.bf16.msra.mxu0 0
    %1619 = vmatprep.subr.bf16.mxu0 0
    %1620 = vmatpush2.bf16.msra.mxu0 0
    %1621 = vmatprep.subr.bf16.mxu0 0
    %1622 = vmatpush2.bf16.msra.mxu0 0
    %1623 = vmatprep.subr.bf16.mxu0 0
    %1624 = vmatpush2.bf16.msra.mxu0 0
    %1625 = vmatprep.subr.bf16.mxu0 0
    %1626 = vmatpush2.bf16.msra.mxu0 0
    %1627 = vmatprep.subr.bf16.mxu0 0
    %1628 = vmatpush2.bf16.msra.mxu0 0
    %1629 = vmatprep.subr.bf16.mxu0 0
    %1630 = vmatpush2.bf16.msra.mxu0 0
    %1631 = vmatprep.subr.bf16.mxu0 0
    %1632 = vmatpush2.bf16.msra.mxu0 0
    %1633 = vmatprep.mubr.bf16.mxu0 0
    %1634 = vmatmul.mubr.bf16.gmra.mxu0 %v1600
    %v1635 = vpop.f32.mrf.mxu0
    %v1636 = vadd.f32 0.0, %v1635
    %v1637 = vpop.f32.mrf.mxu0
    %v1638 = vadd.f32 0.0, %v1637
    %v1639 = vpop.f32.mrf.mxu0
    %v1640 = vpop.f32.mrf.mxu0
    %1641 = vdwg.mxu0
    %1642 = vmatprep.subr.bf16.mxu0 %v736
    %1643 = vmatpush1.bf16.msra.mxu0 %v735
    %1644 = vmatprep.subr.bf16.mxu0 %v732
    %1645 = vmatpush1.bf16.msra.mxu0 %v731
    %1646 = vmatprep.subr.bf16.mxu0 %v728
    %1647 = vmatpush1.bf16.msra.mxu0 %v727
    %1648 = vmatprep.subr.bf16.mxu0 %v724
    %1649 = vmatpush1.bf16.msra.mxu0 %v723
    %1650 = vmatprep.subr.bf16.mxu0 %v720
    %1651 = vmatpush1.bf16.msra.mxu0 %v719
    %1652 = vmatprep.subr.bf16.mxu0 %v716
    %1653 = vmatpush1.bf16.msra.mxu0 %v715
    %1654 = vmatprep.subr.bf16.mxu0 %v712
    %1655 = vmatpush1.bf16.msra.mxu0 %v711
    %1656 = vmatprep.subr.bf16.mxu0 %v708
    %1657 = vmatpush1.bf16.msra.mxu0 %v707
    %1658 = vmatprep.subr.bf16.mxu0 0
    %1659 = vmatpush2.bf16.msra.mxu0 0
    %1660 = vmatprep.subr.bf16.mxu0 0
    %1661 = vmatpush2.bf16.msra.mxu0 0
    %1662 = vmatprep.subr.bf16.mxu0 0
    %1663 = vmatpush2.bf16.msra.mxu0 0
    %1664 = vmatprep.subr.bf16.mxu0 0
    %1665 = vmatpush2.bf16.msra.mxu0 0
    %1666 = vmatprep.subr.bf16.mxu0 0
    %1667 = vmatpush2.bf16.msra.mxu0 0
    %1668 = vmatprep.subr.bf16.mxu0 0
    %1669 = vmatpush2.bf16.msra.mxu0 0
    %1670 = vmatprep.subr.bf16.mxu0 0
    %1671 = vmatpush2.bf16.msra.mxu0 0
    %1672 = vmatprep.subr.bf16.mxu0 0
    %1673 = vmatpush2.bf16.msra.mxu0 0
    %1674 = vmatprep.mubr.bf16.mxu0 0
    %1675 = vmatmul.mubr.bf16.gmra.mxu0 %v1600
    %v1676 = vpop.f32.mrf.mxu0
    %v1677 = vadd.f32 0.0, %v1676
    %v1678 = vpop.f32.mrf.mxu0
    %v1679 = vadd.f32 0.0, %v1678
    %v1680 = vpop.f32.mrf.mxu0
    %v1681 = vpop.f32.mrf.mxu0
    %1682 = vdwg.mxu0
    %v1683 = vadd.f32 %v1596, %v1636
    %v1684 = vadd.f32 %v1597, %v1638
    %v1685 = vadd.f32 %v1598, %v1677
    %v1686 = vadd.f32 %v1599, %v1679
    %v1687 = vxor.u32 %v1683, 2147483648
    %v1688 = vmul.f32 %v1687, 1.442695
    %v1689 = vpow.pop %v1688
    %v1690 = vadd.f32 %v1689, 1.0
    %v1691 = vrcp.pop %v1690
    %v1692 = vmul.f32 1.0, %v1691
    %v1693 = vxor.u32 %v1684, 2147483648
    %v1694 = vmul.f32 %v1693, 1.442695
    %v1695 = vpow.pop %v1694
    %v1696 = vadd.f32 %v1695, 1.0
    %v1697 = vrcp.pop %v1696
    %v1698 = vmul.f32 1.0, %v1697
    %v1699 = vtanh.pop %v1685
    %v1700 = vxor.u32 %v1686, 2147483648
    %v1701 = vmul.f32 %v1700, 1.442695
    %v1702 = vpow.pop %v1701
    %v1703 = vadd.f32 %v1702, 1.0
    %v1704 = vrcp.pop %v1703
    %v1705 = vmul.f32 1.0, %v1704
    %v1706 = vmul.f32 %v1698, %v1590
    %v1707 = vmul.f32 %v1692, %v1699
    %v1708 = vadd.f32 %v1706, %v1707
    %v1709 = vtanh.pop %v1708
    %v1710 = vmul.f32 %v1705, %v1709
    %v1711 = vmul.f32 %v1710, %v883
    %1712 = vadd.xlane.f32.xlu0 %v1711
    %v1713 = vpop.xlane.xlu0 %1712
    %vm1714 = vcmask 7168
    %v1715 = vsel %vm1714, %v887, %v1005
    %vm1716 = vcmask 15360
    %v1717 = vsel %vm1716, %v1715, %v1123
    %vm1718 = vcmask 23552
    %v1719 = vsel %vm1718, %v1717, %v1241
    %vm1720 = vcmask 31744
    %v1721 = vsel %vm1720, %v1719, %v1359
    %vm1722 = vcmask 39936
    %v1723 = vsel %vm1722, %v1721, %v1477
    %v1724 = vsel %vm86, %v1723, %v1595
    %vm1725 = vcmask 56320
    %v1726 = vsel %vm1725, %v1724, %v1713
    %v1727 = vlaneseq
    %v1728 = vand.u32 %v1727, 127
    %v1729 = vld [vmem:[%s1] sm:$0xff]
    %1730 = vset.pattern.permute.xlu0 0
    %1731 = vperm.xlu0 %1730, %v1729
    %v1732 = vpop.permute.xlu0 %1731
    %vm1733 = vcmp.lt.s32.totalorder %v1728, %v1732
    %v1734 = vsel %vm1733, 1, 0
    %v1735 = vcvt.s32.f32 %v1734
    %v1736 = vmul.f32 %v1735, %v1726
    %s1737 = sld [smem:[#allocation3]]
    %v1738 = vstv %s1737
    %v1739 = vadd.f32 %v1736, %v1738
    %v1740 = vxor.u32 %v1739, 2147483648
    %v1741 = vmul.f32 %v1740, 1.442695
    %v1742 = vpow.pop %v1741
    %v1743 = vadd.f32 %v1742, 1.0
    %v1744 = vrcp.pop %v1743
    %v1745 = vmul.f32 1.0, %v1744
    %v1746 = vld [vmem:[%s2] sm:$0xff]
    %vm1747 = vcmp.gt.f32.partialorder %v1746, 0.5
    %v1748 = vsel %vm1747, 0.0, %v1745
    %vm1749 = vcmask 64512
    %1750 = vst.msk [vmem:[#allocation9] sm:$0xff] %vm1749, %v1748
    // Predicated region
    $region50: #{tpu_custom_call.1} parent=1 // pred_check
      _
    $region51: #{tpu_custom_call.1} parent=1 // pred_check_branch
      %1752 = sbr.rel (0) target = $region53
    $region52: #{tpu_custom_call.1} parent=1 // pred_region
      %s1754 = ssub.s32 128, 128
      %1755 = vsyncadd [#allocation6], %s1754
      %s1757 = sshll.u32 [#allocation9], 4
      %s1758 = int_to_ptr.vmem [resolvable:$true] %s1757
      %1760 = dma.vmem_to_hbm [thread:$0]  %s1758, 128, %s10, [#allocation6]
    $region53: #{tpu_custom_call.1} parent=1 // pred_fallthru
      _
    // Predicated region
    $region54: #{tpu_custom_call.1} parent=1 // pred_check
      _
    $region55: #{tpu_custom_call.1} parent=1 // pred_check_branch
      %1762 = sbr.rel (0) target = $region57
    $region56: #{tpu_custom_call.1} parent=1 // pred_region
      %1763 = dma.done [#allocation6], 128
    $region57: #{tpu_custom_call.1} parent=1 // pred_fallthru
      _
    %1764 = vsyncpa [#allocation5], 1
    %1765 = vsyncpa [#allocation8], 1
    %1766 = vsyncpa [#allocation6], 1

</llo_original>
